<compile_context>
chip_gen: v7x
topology: tpu7x:2x2x1
jax: 0.10.0
libtpu: 0.0.40
codegen_flags: <defaults>
</compile_context>

<pallas_src>
import functools

import numpy as np

import jax
import jax.numpy as jnp
from jax.experimental import pallas as pl
from jax.experimental.pallas import tpu as pltpu


# --------------------------------------------------------------------------------------- kernel

def _upblock_kernel(x3_ref, b1_ref, b2_ref, fold_ref, bcast_ref, gb_ref, out_ref, y1_ref):
    f32 = jnp.float32
    bf16 = jnp.bfloat16
    eps = 1e-5

    n_img, h, lanes2 = out_ref.shape      # lanes2 = 2 * Wo * Cout (both row parities on lanes)
    lanes = lanes2 // 2                   # Wo * Cout   (one parity block)
    cout = fold_ref.shape[1]
    wo = lanes // cout
    count = n_img * 2 * h * wo            # elements per channel in each BN reduction
    inv_count = 1.0 / count

    def fold_per_channel(row):            # (1, lanes2) -> (1, cout): fold the x/parity lane blocks
        return jnp.dot(row, fold_ref[...], preferred_element_type=f32)

    # ---------------- stage 1: ConvTranspose2d(k=4, s=2, p=1), phase-decomposed ----------------
    # One fat dot: M = n*h (all images), K = 3*W*Cin (row taps), N = 2*Wo*Cout (both parities).
    acc1 = jnp.dot(x3_ref[...], b1_ref[...], preferred_element_type=f32)     # (n*h, lanes2)

    # ---------------- BatchNorm2d #1 (training batch stats, two-pass centered) ------------------
    mean1_c = fold_per_channel(jnp.sum(acc1, axis=0, keepdims=True)) * inv_count   # (1, cout)
    mean1_t = jnp.dot(mean1_c, bcast_ref[...], preferred_element_type=f32)         # (1, lanes2)
    d1 = acc1 - mean1_t
    var1_c = fold_per_channel(jnp.sum(d1 * d1, axis=0, keepdims=True)) * inv_count
    scale1_c = gb_ref[0:1, :] * jax.lax.rsqrt(var1_c + eps)                        # (1, cout)
    shift1_c = gb_ref[1:2, :] - mean1_c * scale1_c
    ss1 = jnp.dot(jnp.concatenate([scale1_c, shift1_c], axis=0), bcast_ref[...],
                  preferred_element_type=f32)                                      # (2, lanes2)
    y1 = jnp.maximum(acc1 * ss1[0:1, :] + ss1[1:2, :], 0.0).astype(bf16)           # (n*h, lanes2)

    # stage y1 into the row-padded VMEM scratch (bf16): row r = row-pair r-1, rows 0/h+1 are zero
    zrow = jnp.zeros((1, lanes2), bf16)
    for nn in range(n_img):
        y1_ref[nn, 0:1, :] = zrow
        y1_ref[nn, 1:h + 1, :] = y1[nn * h:(nn + 1) * h, :]
        y1_ref[nn, h + 1:h + 2, :] = zrow

    # ---------------- stage 2: Conv2d(3x3, pad=1) on the phase-structured upsampled map ---------
    # One dot per image: K = 4*lanes (taps p1[i-1], p0[i], p1[i], p0[i+1]), N = 2*lanes.
    acc2 = []
    for nn in range(n_img):
        x2 = jnp.concatenate([
            y1_ref[nn, 0:h, lanes:lanes2],        # p1[i-1]
            y1_ref[nn, 1:h + 1, :],               # p0[i] | p1[i]
            y1_ref[nn, 2:h + 2, 0:lanes],         # p0[i+1]
        ], axis=-1)                               # (h, 4*lanes) bf16, lane-aligned pieces
        acc2.append(jnp.dot(x2, b2_ref[...], preferred_element_type=f32))   # (h, lanes2)

    # ---------------- BatchNorm2d #2 + ReLU, lane-dense stores ----------------------------------
    srow2 = jnp.zeros((1, lanes2), f32)
    for a in acc2:
        srow2 = srow2 + jnp.sum(a, axis=0, keepdims=True)
    mean2_c = fold_per_channel(srow2) * inv_count
    mean2_t = jnp.dot(mean2_c, bcast_ref[...], preferred_element_type=f32)
    vrow2 = jnp.zeros((1, lanes2), f32)
    for a in acc2:
        d = a - mean2_t
        vrow2 = vrow2 + jnp.sum(d * d, axis=0, keepdims=True)
    var2_c = fold_per_channel(vrow2) * inv_count
    scale2_c = gb_ref[2:3, :] * jax.lax.rsqrt(var2_c + eps)
    shift2_c = gb_ref[3:4, :] - mean2_c * scale2_c
    ss2 = jnp.dot(jnp.concatenate([scale2_c, shift2_c], axis=0), bcast_ref[...],
                  preferred_element_type=f32)                                      # (2, lanes2)

    for nn in range(n_img):
        out_ref[nn, :, :] = jnp.maximum(acc2[nn] * ss2[0:1, :] + ss2[1:2, :], 0.0)


# --------------------------------------------------------------------------- weight-matrix glue

def _build_transpose_conv_mats(wt, w_in, cin, cout):
    """Banded matrices for the phase-decomposed ConvTranspose2d(k=4, s=2, p=1).

    Returns (2, 2, w_in*cin, 2*w_in*cout): [ey, a] maps a packed input row (lane = j*cin + ci)
    to a packed output row of row-parity ey (lane = (2j+ex)*cout + co) for row tap a.
    x-taps, x-parities and the x zero padding are folded into the band structure.
    """
    wo = 2 * w_in
    # equivalent forward-conv weight: flip spatially, swap in/out channels
    wconv = jnp.transpose(wt[:, :, ::-1, ::-1], (1, 0, 2, 3))          # (cout, cin, 4, 4)
    rows = []
    for ey in range(2):
        per_a = []
        for a in range(2):
            m = jnp.zeros((w_in * cin, wo * cout), jnp.float32)
            for ex in range(2):
                for b in range(2):
                    sel = np.zeros((w_in, wo), np.float32)
                    for j in range(w_in):
                        jc = j + b - 1 + ex                            # input column feeding x = 2j+ex
                        if 0 <= jc < w_in:
                            sel[jc, 2 * j + ex] = 1.0
                    tap = wconv[:, :, 2 * a + ey, 2 * b + ex].T        # (cin, cout)
                    m = m + jnp.kron(jnp.asarray(sel), tap)
            per_a.append(m)
        rows.append(jnp.stack(per_a))
    return jnp.stack(rows)                                             # (2, 2, w_in*cin, wo*cout)


def _build_stage1_mat(wt, w_in, cin, cout):
    """Assemble the single stage-1 matrix (3*w_in*cin, 2*Wo*Cout): K blocks = row offsets r=0..2
    of the 3-row-packed input; column blocks = the two output-row parities."""
    sub = _build_transpose_conv_mats(wt, w_in, cin, cout)              # (2, 2, w*cin, lanes)
    lanes = 2 * w_in * cout
    k = w_in * cin
    b1 = jnp.zeros((3 * k, 2 * lanes), jnp.float32)
    for ey in range(2):
        for a in range(2):
            r = ey + a                                                 # padded-row offset of this tap
            b1 = b1.at[r * k:(r + 1) * k, ey * lanes:(ey + 1) * lanes].set(sub[ey, a])
    return b1


def _build_post_conv_mats(wp, wo, cout):
    """Block-banded matrices for the 3x3 conv: (3, wo*cout, wo*cout), one per kernel row dy.
    Folds the 3 x-taps and the x zero-padding into the lane axis."""
    mats = []
    for dy in range(3):
        m = jnp.zeros((wo * cout, wo * cout), jnp.float32)
        for dx in range(3):
            sel = np.eye(wo, k=1 - dx, dtype=np.float32)               # sel[x_in, x_out]: x_in = x_out + dx - 1
            tap = wp[:, :, dy, dx].T                                   # (cin, cout)
            m = m + jnp.kron(jnp.asarray(sel), tap)
        mats.append(m)
    return jnp.stack(mats)                                             # (3, wo*cout, wo*cout)


def _build_stage2_mat(wp, wo, cout):
    """Assemble the single stage-2 matrix (4*lanes, 2*lanes):
    K blocks = taps [p1[i-1], p0[i], p1[i], p0[i+1]]; column blocks = output-row parities."""
    b2 = _build_post_conv_mats(wp, wo, cout)                           # (3, lanes, lanes)
    lanes = wo * cout
    m = jnp.zeros((4 * lanes, 2 * lanes), jnp.float32)
    for dy in range(3):
        # parity 0 (rows 2i): taps p1[i-1], p0[i], p1[i]  -> K blocks 0,1,2
        m = m.at[dy * lanes:(dy + 1) * lanes, 0:lanes].set(b2[dy])
        # parity 1 (rows 2i+1): taps p0[i], p1[i], p0[i+1] -> K blocks 1,2,3
        m = m.at[(dy + 1) * lanes:(dy + 2) * lanes, lanes:2 * lanes].set(b2[dy])
    return m


# ------------------------------------------------------------------------------ UpBlock forward

def upblock_forward(x_nchw, params, skipped=None):
    if skipped is not None:
        x_nchw = jnp.concatenate([skipped, x_nchw], axis=1)

    n, cin, h, w = x_nchw.shape
    wt = params["w_transpose"]                       # (cin, cout, 4, 4)  PyTorch ConvTranspose2d layout
    wp = params["w_post"]                            # (cout, cout, 3, 3) PyTorch Conv2d layout
    cout = wt.shape[1]
    ho, wo = 2 * h, 2 * w
    lanes = wo * cout                                # one parity block of packed output lanes
    lanes2 = 2 * lanes
    assert lanes % 128 == 0, "lane-dense design requires Wo*Cout to be a multiple of 128"
    # (h ideally a multiple of 8 for aligned sublane tiles; not required for correctness)

    # XLA glue: layout packing + weight-matrix construction (tiny, reshape/kron only)
    x_nhwc = jnp.transpose(x_nchw, (0, 2, 3, 1)).astype(jnp.float32)
    xp = jnp.pad(x_nhwc.reshape(n, h, w * cin), ((0, 0), (1, 1), (0, 0)))    # row-padded, x-packed
    # 3-row K packing: row i holds padded rows i, i+1, i+2 -> one fat stage-1 matmul, bf16 DMA
    x3 = jnp.concatenate([xp[:, 0:h, :], xp[:, 1:h + 1, :], xp[:, 2:h + 2, :]], axis=-1)
    x3 = x3.reshape(n * h, 3 * w * cin).astype(jnp.bfloat16)

    b1m = _build_stage1_mat(wt, w, cin, cout).astype(jnp.bfloat16)           # (3*w*cin, lanes2)
    b2m = _build_stage2_mat(wp, wo, cout).astype(jnp.bfloat16)               # (4*lanes, lanes2)

    fold = jnp.asarray(np.tile(np.eye(cout, dtype=np.float32), (2 * wo, 1)))  # (lanes2, cout)
    bcast = fold.T                                                            # (cout, lanes2)
    gb = jnp.stack([params["gamma1"], params["beta1"],
                    params["gamma2"], params["beta2"]]).astype(jnp.float32)   # (4, cout)

    out = pl.pallas_call(
        _upblock_kernel,
        out_shape=jax.ShapeDtypeStruct((n, h, lanes2), jnp.float32),
        grid_spec=pltpu.PrefetchScalarGridSpec(
            num_scalar_prefetch=0,
            grid=(1,),
            in_specs=[
                pl.BlockSpec((n * h, 3 * w * cin), lambda i: (0, 0)),
                pl.BlockSpec((3 * w * cin, lanes2), lambda i: (0, 0)),
                pl.BlockSpec((4 * lanes, lanes2), lambda i: (0, 0)),
                pl.BlockSpec((lanes2, cout), lambda i: (0, 0)),
                pl.BlockSpec((cout, lanes2), lambda i: (0, 0)),
                pl.BlockSpec((4, cout), lambda i: (0, 0)),
            ],
            out_specs=pl.BlockSpec((n, h, lanes2), lambda i: (0, 0, 0)),
            scratch_shapes=[pltpu.VMEM((n, h + 2, lanes2), jnp.bfloat16)],
        ),
        compiler_params=pltpu.CompilerParams(dimension_semantics=("arbitrary",)),
    )(x3, b1m, b2m, fold, bcast, gb)

    # (n, row-pair i, py*lanes + x*cout + c) -> NCHW (output row = 2i + py)
    out = out.reshape(n, h, 2, wo, cout)
    return jnp.transpose(out, (0, 4, 1, 2, 3)).reshape(n, cout, ho, wo)


# --------------------------------------------------------------------------------------- params

def make_params(key, in_channels, out_channels):
    k1, k2 = jax.random.split(key)
    return {
        "w_transpose": 0.1 * jax.random.normal(k1, (in_channels, out_channels, 4, 4), jnp.float32),
        "w_post": 0.1 * jax.random.normal(k2, (out_channels, out_channels, 3, 3), jnp.float32),
        "gamma1": jnp.ones((out_channels,), jnp.float32),
        "beta1": jnp.zeros((out_channels,), jnp.float32),
        "gamma2": jnp.ones((out_channels,), jnp.float32),
        "beta2": jnp.zeros((out_channels,), jnp.float32),
    }


# ------------------------------------------------------------------------------------ reference

def _reference_upblock(x, wt, wp, g1, b1_, g2, b2_, eps=1e-5):
    """NumPy f64 reference written directly from the PyTorch op definitions."""
    x = np.asarray(x, np.float64)
    wt = np.asarray(wt, np.float64)
    wp = np.asarray(wp, np.float64)
    n, cin, h, w = x.shape
    cout = wt.shape[1]
    ho, wo = 2 * h, 2 * w

    # ConvTranspose2d(k=4, s=2, p=1): out[2i-1+ky, 2j-1+kx] += x[i, j] * wt[:, :, ky, kx]
    buf = np.zeros((n, cout, ho + 2, wo + 2))
    for ky in range(4):
        for kx in range(4):
            contrib = np.einsum('ncij,cd->ndij', x, wt[:, :, ky, kx])
            buf[:, :, ky:ky + ho:2, kx:kx + wo:2] += contrib
    y = buf[:, :, 1:ho + 1, 1:wo + 1]

    def bn_relu(t, g, b):
        mean = t.mean(axis=(0, 2, 3), keepdims=True)
        var = t.var(axis=(0, 2, 3), keepdims=True)          # biased, training-mode BN
        z = (t - mean) / np.sqrt(var + eps)
        z = z * np.asarray(g, np.float64).reshape(1, -1, 1, 1) \
              + np.asarray(b, np.float64).reshape(1, -1, 1, 1)
        return np.maximum(z, 0.0)

    y = bn_relu(y, g1, b1_)

    yp = np.pad(y, ((0, 0), (0, 0), (1, 1), (1, 1)))
    y2 = np.zeros((n, cout, ho, wo))
    for dy in range(3):
        for dx in range(3):
            y2 += np.einsum('ncij,dc->ndij', yp[:, :, dy:dy + ho, dx:dx + wo], wp[:, :, dy, dx])
    return bn_relu(y2, g2, b2_)


# ------------------------------------------------------------------------------------------ main

if __name__ == "__main__":
    key = jax.random.PRNGKey(0)
    kx, kp = jax.random.split(key)

    in_channels, out_channels = 4, 8
    x = jax.random.normal(kx, (2, in_channels, 8, 8), jnp.float32)      # NCHW input
    params = make_params(kp, in_channels, out_channels)

    fwd = jax.jit(functools.partial(upblock_forward, params=params))
    out = jax.block_until_ready(fwd(x))

    assert out.shape == (2, out_channels, 16, 16), out.shape
    assert bool(jnp.all(out >= 0.0))                 # ReLU output
    assert bool(jnp.all(jnp.isfinite(out)))

    ref = _reference_upblock(x, params["w_transpose"], params["w_post"],
                             params["gamma1"], params["beta1"],
                             params["gamma2"], params["beta2"])
    err = float(np.max(np.abs(np.asarray(out, np.float64) - ref)))
    assert err < 0.08, f"max abs error vs reference: {err}"             # bf16 conv operands, f32 accum

    print("KERNEL_OK")
</pallas_src>

<mosaic_0001>
module attributes {stable_mosaic.version = 11 : i64} {
  func.func @_upblock_kernel(%arg0: i32, %arg1: memref<16x96xbf16, #tpu.memory_space<vmem>>, %arg2: memref<96x256xbf16, #tpu.memory_space<vmem>>, %arg3: memref<512x256xbf16, #tpu.memory_space<vmem>>, %arg4: memref<256x8xf32, #tpu.memory_space<vmem>>, %arg5: memref<8x256xf32, #tpu.memory_space<vmem>>, %arg6: memref<4x8xf32, #tpu.memory_space<vmem>>, %arg7: memref<2x8x256xf32, #tpu.memory_space<vmem>>, %arg8: memref<2x10x256xbf16, #tpu.memory_space<vmem>>) attributes {dimension_semantics = [#tpu.dimension_semantics<arbitrary>], iteration_bounds = array<i64: 1>, scalar_prefetch = 0 : i64, scratch_operands = 1 : i64, tpu.core_type = #tpu.core_type<tc>, window_params = [{pipeline_mode = #tpu.pipeline_mode<synchronous>, transform_indices = @transform_0, window_bounds = array<i64: 16, 96>}, {pipeline_mode = #tpu.pipeline_mode<synchronous>, transform_indices = @transform_1, window_bounds = array<i64: 96, 256>}, {pipeline_mode = #tpu.pipeline_mode<synchronous>, transform_indices = @transform_2, window_bounds = array<i64: 512, 256>}, {pipeline_mode = #tpu.pipeline_mode<synchronous>, transform_indices = @transform_3, window_bounds = array<i64: 256, 8>}, {pipeline_mode = #tpu.pipeline_mode<synchronous>, transform_indices = @transform_4, window_bounds = array<i64: 8, 256>}, {pipeline_mode = #tpu.pipeline_mode<synchronous>, transform_indices = @transform_5, window_bounds = array<i64: 4, 8>}, {pipeline_mode = #tpu.pipeline_mode<synchronous>, transform_indices = @transform_6, window_bounds = array<i64: 2, 8, 256>}]} {
    %c0 = arith.constant 0 : index
    %c0_0 = arith.constant 0 : index
    %0 = vector.load %arg1[%c0, %c0_0] : memref<16x96xbf16, #tpu.memory_space<vmem>>, vector<16x96xbf16>
    %c0_1 = arith.constant 0 : index
    %c0_2 = arith.constant 0 : index
    %1 = vector.load %arg2[%c0_1, %c0_2] : memref<96x256xbf16, #tpu.memory_space<vmem>>, vector<96x256xbf16>
    %cst = arith.constant dense<0.000000e+00> : vector<16x256xf32>
    %2 = tpu.matmul %0, %1, %cst {dimension_numbers = #tpu.dot_dimension_numbers<[1], [0], [0], [1], [0, 0, 1, 1], [], []>} : vector<16x96xbf16>, vector<96x256xbf16>, vector<16x256xf32> -> vector<16x256xf32>
    %cst_3 = arith.constant dense<0.000000e+00> : vector<256xf32>
    %3 = vector.multi_reduction <add>, %2, %cst_3 [0] : vector<16x256xf32> to vector<256xf32>
    %4 = vector.shape_cast %3 : vector<256xf32> to vector<1x256xf32>
    %c0_4 = arith.constant 0 : index
    %c0_5 = arith.constant 0 : index
    %5 = vector.load %arg4[%c0_4, %c0_5] : memref<256x8xf32, #tpu.memory_space<vmem>>, vector<256x8xf32>
    %cst_6 = arith.constant dense<0.000000e+00> : vector<1x8xf32>
    %6 = tpu.matmul %4, %5, %cst_6 {dimension_numbers = #tpu.dot_dimension_numbers<[1], [0], [0], [1], [0, 0, 1, 1], [], []>} : vector<1x256xf32>, vector<256x8xf32>, vector<1x8xf32> -> vector<1x8xf32>
    %cst_7 = arith.constant 0.001953125 : f32
    %7 = vector.broadcast %cst_7 : f32 to vector<1x8xf32>
    %8 = arith.mulf %6, %7 : vector<1x8xf32>
    %c0_8 = arith.constant 0 : index
    %c0_9 = arith.constant 0 : index
    %9 = vector.load %arg5[%c0_8, %c0_9] : memref<8x256xf32, #tpu.memory_space<vmem>>, vector<8x256xf32>
    %cst_10 = arith.constant dense<0.000000e+00> : vector<1x256xf32>
    %10 = tpu.matmul %8, %9, %cst_10 {dimension_numbers = #tpu.dot_dimension_numbers<[1], [0], [0], [1], [0, 0, 1, 1], [], []>} : vector<1x8xf32>, vector<8x256xf32>, vector<1x256xf32> -> vector<1x256xf32>
    %11 = vector.broadcast %10 : vector<1x256xf32> to vector<16x256xf32>
    %12 = arith.subf %2, %11 : vector<16x256xf32>
    %13 = arith.mulf %12, %12 : vector<16x256xf32>
    %cst_11 = arith.constant dense<0.000000e+00> : vector<256xf32>
    %14 = vector.multi_reduction <add>, %13, %cst_11 [0] : vector<16x256xf32> to vector<256xf32>
    %15 = vector.shape_cast %14 : vector<256xf32> to vector<1x256xf32>
    %c0_12 = arith.constant 0 : index
    %c0_13 = arith.constant 0 : index
    %16 = vector.load %arg4[%c0_12, %c0_13] : memref<256x8xf32, #tpu.memory_space<vmem>>, vector<256x8xf32>
    %cst_14 = arith.constant dense<0.000000e+00> : vector<1x8xf32>
    %17 = tpu.matmul %15, %16, %cst_14 {dimension_numbers = #tpu.dot_dimension_numbers<[1], [0], [0], [1], [0, 0, 1, 1], [], []>} : vector<1x256xf32>, vector<256x8xf32>, vector<1x8xf32> -> vector<1x8xf32>
    %cst_15 = arith.constant 0.001953125 : f32
    %18 = vector.broadcast %cst_15 : f32 to vector<1x8xf32>
    %19 = arith.mulf %17, %18 : vector<1x8xf32>
    %c0_16 = arith.constant 0 : index
    %c0_17 = arith.constant 0 : index
    %20 = vector.load %arg6[%c0_16, %c0_17] : memref<4x8xf32, #tpu.memory_space<vmem>>, vector<1x8xf32>
    %cst_18 = arith.constant 9.99999974E-6 : f32
    %21 = vector.broadcast %cst_18 : f32 to vector<1x8xf32>
    %22 = arith.addf %19, %21 : vector<1x8xf32>
    %23 = math.rsqrt %22 : vector<1x8xf32>
    %24 = arith.mulf %20, %23 : vector<1x8xf32>
    %c1 = arith.constant 1 : index
    %c0_19 = arith.constant 0 : index
    %25 = vector.load %arg6[%c1, %c0_19] : memref<4x8xf32, #tpu.memory_space<vmem>>, vector<1x8xf32>
    %26 = arith.mulf %8, %24 : vector<1x8xf32>
    %27 = arith.subf %25, %26 : vector<1x8xf32>
    %28 = tpu.concatenate %24, %27 in 0 : vector<1x8xf32>, vector<1x8xf32> -> vector<2x8xf32>
    %c0_20 = arith.constant 0 : index
    %c0_21 = arith.constant 0 : index
    %29 = vector.load %arg5[%c0_20, %c0_21] : memref<8x256xf32, #tpu.memory_space<vmem>>, vector<8x256xf32>
    %cst_22 = arith.constant dense<0.000000e+00> : vector<2x256xf32>
    %30 = tpu.matmul %28, %29, %cst_22 {dimension_numbers = #tpu.dot_dimension_numbers<[1], [0], [0], [1], [0, 0, 1, 1], [], []>} : vector<2x8xf32>, vector<8x256xf32>, vector<2x256xf32> -> vector<2x256xf32>
    %31 = vector.extract_strided_slice %30 {offsets = [0, 0], sizes = [1, 256], strides = [1, 1]} : vector<2x256xf32> to vector<1x256xf32>
    %32 = vector.broadcast %31 : vector<1x256xf32> to vector<16x256xf32>
    %33 = arith.mulf %2, %32 : vector<16x256xf32>
    %34 = vector.extract_strided_slice %30 {offsets = [1, 0], sizes = [1, 256], strides = [1, 1]} : vector<2x256xf32> to vector<1x256xf32>
    %35 = vector.broadcast %34 : vector<1x256xf32> to vector<16x256xf32>
    %36 = arith.addf %33, %35 : vector<16x256xf32>
    %cst_23 = arith.constant 0.000000e+00 : f32
    %37 = vector.broadcast %cst_23 : f32 to vector<16x256xf32>
    %38 = arith.maximumf %36, %37 : vector<16x256xf32>
    %39 = arith.truncf %38 : vector<16x256xf32> to vector<16x256xbf16>
    %cst_24 = arith.constant 0.000000e+00 : bf16
    %40 = vector.broadcast %cst_24 : bf16 to vector<1x256xbf16>
    %c0_25 = arith.constant 0 : index
    %c0_26 = arith.constant 0 : index
    %c0_27 = arith.constant 0 : index
    %41 = vector.load %arg8[%c0_25, %c0_26, %c0_27] : memref<2x10x256xbf16, #tpu.memory_space<vmem>>, vector<1x1x256xbf16>
    %42 = vector.shape_cast %41 : vector<1x1x256xbf16> to vector<1x256xbf16>
    %43 = vector.shape_cast %40 : vector<1x256xbf16> to vector<1x1x256xbf16>
    tpu.vector_store %arg8[%c0_25, %c0_26, %c0_27], %43 {strides = array<i32>} : memref<2x10x256xbf16, #tpu.memory_space<vmem>>, vector<1x1x256xbf16>,
    %44 = vector.extract_strided_slice %39 {offsets = [0, 0], sizes = [8, 256], strides = [1, 1]} : vector<16x256xbf16> to vector<8x256xbf16>
    %c0_28 = arith.constant 0 : index
    %c1_29 = arith.constant 1 : index
    %c0_30 = arith.constant 0 : index
    %45 = vector.load %arg8[%c0_28, %c1_29, %c0_30] : memref<2x10x256xbf16, #tpu.memory_space<vmem>>, vector<1x8x256xbf16>
    %46 = vector.shape_cast %45 : vector<1x8x256xbf16> to vector<8x256xbf16>
    %47 = vector.shape_cast %44 : vector<8x256xbf16> to vector<1x8x256xbf16>
    tpu.vector_store %arg8[%c0_28, %c1_29, %c0_30], %47 {strides = array<i32>} : memref<2x10x256xbf16, #tpu.memory_space<vmem>>, vector<1x8x256xbf16>,
    %c0_31 = arith.constant 0 : index
    %c9 = arith.constant 9 : index
    %c0_32 = arith.constant 0 : index
    %48 = vector.load %arg8[%c0_31, %c9, %c0_32] : memref<2x10x256xbf16, #tpu.memory_space<vmem>>, vector<1x1x256xbf16>
    %49 = vector.shape_cast %48 : vector<1x1x256xbf16> to vector<1x256xbf16>
    %50 = vector.shape_cast %40 : vector<1x256xbf16> to vector<1x1x256xbf16>
    tpu.vector_store %arg8[%c0_31, %c9, %c0_32], %50 {strides = array<i32>} : memref<2x10x256xbf16, #tpu.memory_space<vmem>>, vector<1x1x256xbf16>,
    %c1_33 = arith.constant 1 : index
    %c0_34 = arith.constant 0 : index
    %c0_35 = arith.constant 0 : index
    %51 = vector.load %arg8[%c1_33, %c0_34, %c0_35] : memref<2x10x256xbf16, #tpu.memory_space<vmem>>, vector<1x1x256xbf16>
    %52 = vector.shape_cast %51 : vector<1x1x256xbf16> to vector<1x256xbf16>
    %53 = vector.shape_cast %40 : vector<1x256xbf16> to vector<1x1x256xbf16>
    tpu.vector_store %arg8[%c1_33, %c0_34, %c0_35], %53 {strides = array<i32>} : memref<2x10x256xbf16, #tpu.memory_space<vmem>>, vector<1x1x256xbf16>,
    %54 = vector.extract_strided_slice %39 {offsets = [8, 0], sizes = [8, 256], strides = [1, 1]} : vector<16x256xbf16> to vector<8x256xbf16>
    %c1_36 = arith.constant 1 : index
    %c1_37 = arith.constant 1 : index
    %c0_38 = arith.constant 0 : index
    %55 = vector.load %arg8[%c1_36, %c1_37, %c0_38] : memref<2x10x256xbf16, #tpu.memory_space<vmem>>, vector<1x8x256xbf16>
    %56 = vector.shape_cast %55 : vector<1x8x256xbf16> to vector<8x256xbf16>
    %57 = vector.shape_cast %54 : vector<8x256xbf16> to vector<1x8x256xbf16>
    tpu.vector_store %arg8[%c1_36, %c1_37, %c0_38], %57 {strides = array<i32>} : memref<2x10x256xbf16, #tpu.memory_space<vmem>>, vector<1x8x256xbf16>,
    %c1_39 = arith.constant 1 : index
    %c9_40 = arith.constant 9 : index
    %c0_41 = arith.constant 0 : index
    %58 = vector.load %arg8[%c1_39, %c9_40, %c0_41] : memref<2x10x256xbf16, #tpu.memory_space<vmem>>, vector<1x1x256xbf16>
    %59 = vector.shape_cast %58 : vector<1x1x256xbf16> to vector<1x256xbf16>
    %60 = vector.shape_cast %40 : vector<1x256xbf16> to vector<1x1x256xbf16>
    tpu.vector_store %arg8[%c1_39, %c9_40, %c0_41], %60 {strides = array<i32>} : memref<2x10x256xbf16, #tpu.memory_space<vmem>>, vector<1x1x256xbf16>,
    %c0_42 = arith.constant 0 : index
    %c0_43 = arith.constant 0 : index
    %c128 = arith.constant 128 : index
    %61 = vector.load %arg8[%c0_42, %c0_43, %c128] : memref<2x10x256xbf16, #tpu.memory_space<vmem>>, vector<1x8x128xbf16>
    %62 = vector.shape_cast %61 : vector<1x8x128xbf16> to vector<8x128xbf16>
    %c0_44 = arith.constant 0 : index
    %c1_45 = arith.constant 1 : index
    %c0_46 = arith.constant 0 : index
    %63 = vector.load %arg8[%c0_44, %c1_45, %c0_46] : memref<2x10x256xbf16, #tpu.memory_space<vmem>>, vector<1x8x256xbf16>
    %64 = vector.shape_cast %63 : vector<1x8x256xbf16> to vector<8x256xbf16>
    %c0_47 = arith.constant 0 : index
    %c2 = arith.constant 2 : index
    %c0_48 = arith.constant 0 : index
    %65 = vector.load %arg8[%c0_47, %c2, %c0_48] : memref<2x10x256xbf16, #tpu.memory_space<vmem>>, vector<1x8x128xbf16>
    %66 = vector.shape_cast %65 : vector<1x8x128xbf16> to vector<8x128xbf16>
    %67 = tpu.concatenate %62, %64, %66 in 1 : vector<8x128xbf16>, vector<8x256xbf16>, vector<8x128xbf16> -> vector<8x512xbf16>
    %c0_49 = arith.constant 0 : index
    %c0_50 = arith.constant 0 : index
    %68 = vector.load %arg3[%c0_49, %c0_50] : memref<512x256xbf16, #tpu.memory_space<vmem>>, vector<512x256xbf16>
    %cst_51 = arith.constant dense<0.000000e+00> : vector<8x256xf32>
    %69 = tpu.matmul %67, %68, %cst_51 {dimension_numbers = #tpu.dot_dimension_numbers<[1], [0], [0], [1], [0, 0, 1, 1], [], []>} : vector<8x512xbf16>, vector<512x256xbf16>, vector<8x256xf32> -> vector<8x256xf32>
    %c1_52 = arith.constant 1 : index
    %c0_53 = arith.constant 0 : index
    %c128_54 = arith.constant 128 : index
    %70 = vector.load %arg8[%c1_52, %c0_53, %c128_54] : memref<2x10x256xbf16, #tpu.memory_space<vmem>>, vector<1x8x128xbf16>
    %71 = vector.shape_cast %70 : vector<1x8x128xbf16> to vector<8x128xbf16>
    %c1_55 = arith.constant 1 : index
    %c1_56 = arith.constant 1 : index
    %c0_57 = arith.constant 0 : index
    %72 = vector.load %arg8[%c1_55, %c1_56, %c0_57] : memref<2x10x256xbf16, #tpu.memory_space<vmem>>, vector<1x8x256xbf16>
    %73 = vector.shape_cast %72 : vector<1x8x256xbf16> to vector<8x256xbf16>
    %c1_58 = arith.constant 1 : index
    %c2_59 = arith.constant 2 : index
    %c0_60 = arith.constant 0 : index
    %74 = vector.load %arg8[%c1_58, %c2_59, %c0_60] : memref<2x10x256xbf16, #tpu.memory_space<vmem>>, vector<1x8x128xbf16>
    %75 = vector.shape_cast %74 : vector<1x8x128xbf16> to vector<8x128xbf16>
    %76 = tpu.concatenate %71, %73, %75 in 1 : vector<8x128xbf16>, vector<8x256xbf16>, vector<8x128xbf16> -> vector<8x512xbf16>
    %c0_61 = arith.constant 0 : index
    %c0_62 = arith.constant 0 : index
    %77 = vector.load %arg3[%c0_61, %c0_62] : memref<512x256xbf16, #tpu.memory_space<vmem>>, vector<512x256xbf16>
    %cst_63 = arith.constant dense<0.000000e+00> : vector<8x256xf32>
    %78 = tpu.matmul %76, %77, %cst_63 {dimension_numbers = #tpu.dot_dimension_numbers<[1], [0], [0], [1], [0, 0, 1, 1], [], []>} : vector<8x512xbf16>, vector<512x256xbf16>, vector<8x256xf32> -> vector<8x256xf32>
    %cst_64 = arith.constant 0.000000e+00 : f32
    %79 = vector.broadcast %cst_64 : f32 to vector<1x256xf32>
    %cst_65 = arith.constant dense<0.000000e+00> : vector<256xf32>
    %80 = vector.multi_reduction <add>, %69, %cst_65 [0] : vector<8x256xf32> to vector<256xf32>
    %81 = vector.shape_cast %80 : vector<256xf32> to vector<1x256xf32>
    %82 = arith.addf %79, %81 : vector<1x256xf32>
    %cst_66 = arith.constant dense<0.000000e+00> : vector<256xf32>
    %83 = vector.multi_reduction <add>, %78, %cst_66 [0] : vector<8x256xf32> to vector<256xf32>
    %84 = vector.shape_cast %83 : vector<256xf32> to vector<1x256xf32>
    %85 = arith.addf %82, %84 : vector<1x256xf32>
    %c0_67 = arith.constant 0 : index
    %c0_68 = arith.constant 0 : index
    %86 = vector.load %arg4[%c0_67, %c0_68] : memref<256x8xf32, #tpu.memory_space<vmem>>, vector<256x8xf32>
    %cst_69 = arith.constant dense<0.000000e+00> : vector<1x8xf32>
    %87 = tpu.matmul %85, %86, %cst_69 {dimension_numbers = #tpu.dot_dimension_numbers<[1], [0], [0], [1], [0, 0, 1, 1], [], []>} : vector<1x256xf32>, vector<256x8xf32>, vector<1x8xf32> -> vector<1x8xf32>
    %cst_70 = arith.constant 0.001953125 : f32
    %88 = vector.broadcast %cst_70 : f32 to vector<1x8xf32>
    %89 = arith.mulf %87, %88 : vector<1x8xf32>
    %c0_71 = arith.constant 0 : index
    %c0_72 = arith.constant 0 : index
    %90 = vector.load %arg5[%c0_71, %c0_72] : memref<8x256xf32, #tpu.memory_space<vmem>>, vector<8x256xf32>
    %cst_73 = arith.constant dense<0.000000e+00> : vector<1x256xf32>
    %91 = tpu.matmul %89, %90, %cst_73 {dimension_numbers = #tpu.dot_dimension_numbers<[1], [0], [0], [1], [0, 0, 1, 1], [], []>} : vector<1x8xf32>, vector<8x256xf32>, vector<1x256xf32> -> vector<1x256xf32>
    %cst_74 = arith.constant 0.000000e+00 : f32
    %92 = vector.broadcast %cst_74 : f32 to vector<1x256xf32>
    %93 = vector.broadcast %91 : vector<1x256xf32> to vector<8x256xf32>
    %94 = arith.subf %69, %93 : vector<8x256xf32>
    %95 = arith.mulf %94, %94 : vector<8x256xf32>
    %cst_75 = arith.constant dense<0.000000e+00> : vector<256xf32>
    %96 = vector.multi_reduction <add>, %95, %cst_75 [0] : vector<8x256xf32> to vector<256xf32>
    %97 = vector.shape_cast %96 : vector<256xf32> to vector<1x256xf32>
    %98 = arith.addf %92, %97 : vector<1x256xf32>
    %99 = vector.broadcast %91 : vector<1x256xf32> to vector<8x256xf32>
    %100 = arith.subf %78, %99 : vector<8x256xf32>
    %101 = arith.mulf %100, %100 : vector<8x256xf32>
    %cst_76 = arith.constant dense<0.000000e+00> : vector<256xf32>
    %102 = vector.multi_reduction <add>, %101, %cst_76 [0] : vector<8x256xf32> to vector<256xf32>
    %103 = vector.shape_cast %102 : vector<256xf32> to vector<1x256xf32>
    %104 = arith.addf %98, %103 : vector<1x256xf32>
    %c0_77 = arith.constant 0 : index
    %c0_78 = arith.constant 0 : index
    %105 = vector.load %arg4[%c0_77, %c0_78] : memref<256x8xf32, #tpu.memory_space<vmem>>, vector<256x8xf32>
    %cst_79 = arith.constant dense<0.000000e+00> : vector<1x8xf32>
    %106 = tpu.matmul %104, %105, %cst_79 {dimension_numbers = #tpu.dot_dimension_numbers<[1], [0], [0], [1], [0, 0, 1, 1], [], []>} : vector<1x256xf32>, vector<256x8xf32>, vector<1x8xf32> -> vector<1x8xf32>
    %cst_80 = arith.constant 0.001953125 : f32
    %107 = vector.broadcast %cst_80 : f32 to vector<1x8xf32>
    %108 = arith.mulf %106, %107 : vector<1x8xf32>
    %c2_81 = arith.constant 2 : index
    %c0_82 = arith.constant 0 : index
    %109 = vector.load %arg6[%c2_81, %c0_82] : memref<4x8xf32, #tpu.memory_space<vmem>>, vector<1x8xf32>
    %cst_83 = arith.constant 9.99999974E-6 : f32
    %110 = vector.broadcast %cst_83 : f32 to vector<1x8xf32>
    %111 = arith.addf %108, %110 : vector<1x8xf32>
    %112 = math.rsqrt %111 : vector<1x8xf32>
    %113 = arith.mulf %109, %112 : vector<1x8xf32>
    %c3 = arith.constant 3 : index
    %c0_84 = arith.constant 0 : index
    %114 = vector.load %arg6[%c3, %c0_84] : memref<4x8xf32, #tpu.memory_space<vmem>>, vector<1x8xf32>
    %115 = arith.mulf %89, %113 : vector<1x8xf32>
    %116 = arith.subf %114, %115 : vector<1x8xf32>
    %117 = tpu.concatenate %113, %116 in 0 : vector<1x8xf32>, vector<1x8xf32> -> vector<2x8xf32>
    %c0_85 = arith.constant 0 : index
    %c0_86 = arith.constant 0 : index
    %118 = vector.load %arg5[%c0_85, %c0_86] : memref<8x256xf32, #tpu.memory_space<vmem>>, vector<8x256xf32>
    %cst_87 = arith.constant dense<0.000000e+00> : vector<2x256xf32>
    %119 = tpu.matmul %117, %118, %cst_87 {dimension_numbers = #tpu.dot_dimension_numbers<[1], [0], [0], [1], [0, 0, 1, 1], [], []>} : vector<2x8xf32>, vector<8x256xf32>, vector<2x256xf32> -> vector<2x256xf32>
    %120 = vector.extract_strided_slice %119 {offsets = [0, 0], sizes = [1, 256], strides = [1, 1]} : vector<2x256xf32> to vector<1x256xf32>
    %121 = vector.broadcast %120 : vector<1x256xf32> to vector<8x256xf32>
    %122 = arith.mulf %69, %121 : vector<8x256xf32>
    %123 = vector.extract_strided_slice %119 {offsets = [1, 0], sizes = [1, 256], strides = [1, 1]} : vector<2x256xf32> to vector<1x256xf32>
    %124 = vector.broadcast %123 : vector<1x256xf32> to vector<8x256xf32>
    %125 = arith.addf %122, %124 : vector<8x256xf32>
    %cst_88 = arith.constant 0.000000e+00 : f32
    %126 = vector.broadcast %cst_88 : f32 to vector<8x256xf32>
    %127 = arith.maximumf %125, %126 : vector<8x256xf32>
    %c0_89 = arith.constant 0 : index
    %c0_90 = arith.constant 0 : index
    %c0_91 = arith.constant 0 : index
    %128 = vector.load %arg7[%c0_89, %c0_90, %c0_91] : memref<2x8x256xf32, #tpu.memory_space<vmem>>, vector<1x8x256xf32>
    %129 = vector.shape_cast %128 : vector<1x8x256xf32> to vector<8x256xf32>
    %130 = vector.shape_cast %127 : vector<8x256xf32> to vector<1x8x256xf32>
    tpu.vector_store %arg7[%c0_89, %c0_90, %c0_91], %130 {strides = array<i32>} : memref<2x8x256xf32, #tpu.memory_space<vmem>>, vector<1x8x256xf32>,
    %131 = vector.extract_strided_slice %119 {offsets = [0, 0], sizes = [1, 256], strides = [1, 1]} : vector<2x256xf32> to vector<1x256xf32>
    %132 = vector.broadcast %131 : vector<1x256xf32> to vector<8x256xf32>
    %133 = arith.mulf %78, %132 : vector<8x256xf32>
    %134 = vector.extract_strided_slice %119 {offsets = [1, 0], sizes = [1, 256], strides = [1, 1]} : vector<2x256xf32> to vector<1x256xf32>
    %135 = vector.broadcast %134 : vector<1x256xf32> to vector<8x256xf32>
    %136 = arith.addf %133, %135 : vector<8x256xf32>
    %cst_92 = arith.constant 0.000000e+00 : f32
    %137 = vector.broadcast %cst_92 : f32 to vector<8x256xf32>
    %138 = arith.maximumf %136, %137 : vector<8x256xf32>
    %c1_93 = arith.constant 1 : index
    %c0_94 = arith.constant 0 : index
    %c0_95 = arith.constant 0 : index
    %139 = vector.load %arg7[%c1_93, %c0_94, %c0_95] : memref<2x8x256xf32, #tpu.memory_space<vmem>>, vector<1x8x256xf32>
    %140 = vector.shape_cast %139 : vector<1x8x256xf32> to vector<8x256xf32>
    %141 = vector.shape_cast %138 : vector<8x256xf32> to vector<1x8x256xf32>
    tpu.vector_store %arg7[%c1_93, %c0_94, %c0_95], %141 {strides = array<i32>} : memref<2x8x256xf32, #tpu.memory_space<vmem>>, vector<1x8x256xf32>,
    return
  }
  func.func @transform_0(%arg0: i32) -> (i32, i32) {
    %c0_i32 = arith.constant 0 : i32
    %c0_i32_0 = arith.constant 0 : i32
    %c0_i32_1 = arith.constant 0 : i32
    return %c0_i32, %c0_i32_0 : i32, i32
  }
  func.func @transform_1(%arg0: i32) -> (i32, i32) {
    %c0_i32 = arith.constant 0 : i32
    %c0_i32_0 = arith.constant 0 : i32
    %c0_i32_1 = arith.constant 0 : i32
    return %c0_i32, %c0_i32_0 : i32, i32
  }
  func.func @transform_2(%arg0: i32) -> (i32, i32) {
    %c0_i32 = arith.constant 0 : i32
    %c0_i32_0 = arith.constant 0 : i32
    %c0_i32_1 = arith.constant 0 : i32
    return %c0_i32, %c0_i32_0 : i32, i32
  }
  func.func @transform_3(%arg0: i32) -> (i32, i32) {
    %c0_i32 = arith.constant 0 : i32
    %c0_i32_0 = arith.constant 0 : i32
    %c0_i32_1 = arith.constant 0 : i32
    return %c0_i32, %c0_i32_0 : i32, i32
  }
  func.func @transform_4(%arg0: i32) -> (i32, i32) {
    %c0_i32 = arith.constant 0 : i32
    %c0_i32_0 = arith.constant 0 : i32
    %c0_i32_1 = arith.constant 0 : i32
    return %c0_i32, %c0_i32_0 : i32, i32
  }
  func.func @transform_5(%arg0: i32) -> (i32, i32) {
    %c0_i32 = arith.constant 0 : i32
    %c0_i32_0 = arith.constant 0 : i32
    %c0_i32_1 = arith.constant 0 : i32
    return %c0_i32, %c0_i32_0 : i32, i32
  }
  func.func @transform_6(%arg0: i32) -> (i32, i32, i32) {
    %c0_i32 = arith.constant 0 : i32
    %c0_i32_0 = arith.constant 0 : i32
    %c0_i32_1 = arith.constant 0 : i32
    %c0_i32_2 = arith.constant 0 : i32
    return %c0_i32, %c0_i32_0, %c0_i32_1 : i32, i32, i32
  }
}

</mosaic_0001>

<llo_original>
// kernel: upblock_forward.1
$region0: #{upblock_forward.1}
  #allocation0 [shape = 'u32[]', space=smem, size = 0x4, offset = 0x4, fixed_abs, tag = 'smem constant byte address 0x4 - core index']
  #allocation1 [shape = 'u32[144,128]{1,0:T(1,128)}', space=vmem, size = 0x12000, scoped, tag = 'internal scratch']
  #allocation2 [shape = 'bf16[2,10,256]{2,1,0:T(8,128)(2,1)}', space=vmem, size = 0x4000, scoped, tag = 'scratch operand']
  %s0 = inlined_call_operand.vmem [shape: bf16[16,96], index: 0, kind: input, shape index: {}]
  %s1 = inlined_call_operand.vmem [shape: bf16[96,256], index: 1, kind: input, shape index: {}]
  %s2 = inlined_call_operand.vmem [shape: bf16[512,256], index: 2, kind: input, shape index: {}]
  %s3 = inlined_call_operand.vmem [shape: f32[256,8], index: 3, kind: input, shape index: {}]
  %s4 = inlined_call_operand.vmem [shape: f32[8,256], index: 4, kind: input, shape index: {}]
  %s5 = inlined_call_operand.vmem [shape: f32[4,8], index: 5, kind: input, shape index: {}]
  %s6 = inlined_call_operand.vmem [shape: f32[2,8,256], index: 6, kind: output, shape index: {}]
  %s7 = sld [smem:[#allocation0]]
  $region34: #{upblock_forward.1} parent=0
    _
  %s9 = ssub.s32 1, %s7
  %s10 = scalar_select 0, %s9, %s7
  // Predicated region
  $region2: #{upblock_forward.1} parent=0 // pred_check
    _
  $region3: #{upblock_forward.1} parent=0 // pred_check_branch
    %12 = sbr.rel (0) target = $region5
  $region4: #{upblock_forward.1} parent=0 // pred_region
    _
  $region5: #{upblock_forward.1} parent=0 // pred_fallthru
    _
  // Predicated region
  $region6: #{upblock_forward.1} parent=0 // pred_check
    _
  $region7: #{upblock_forward.1} parent=0 // pred_check_branch
    %14 = sbr.rel (0) target = $region9
  $region8: #{upblock_forward.1} parent=0 // pred_region
    _
  $region9: #{upblock_forward.1} parent=0 // pred_fallthru
    _
  // Predicated region
  $region10: #{upblock_forward.1} parent=0 // pred_check
    _
  $region11: #{upblock_forward.1} parent=0 // pred_check_branch
    %16 = sbr.rel (0) target = $region13
  $region12: #{upblock_forward.1} parent=0 // pred_region
    _
  $region13: #{upblock_forward.1} parent=0 // pred_fallthru
    _
  // Predicated region
  $region14: #{upblock_forward.1} parent=0 // pred_check
    _
  $region15: #{upblock_forward.1} parent=0 // pred_check_branch
    %18 = sbr.rel (0) target = $region17
  $region16: #{upblock_forward.1} parent=0 // pred_region
    _
  $region17: #{upblock_forward.1} parent=0 // pred_fallthru
    _
  // Predicated region
  $region18: #{upblock_forward.1} parent=0 // pred_check
    _
  $region19: #{upblock_forward.1} parent=0 // pred_check_branch
    %20 = sbr.rel (0) target = $region21
  $region20: #{upblock_forward.1} parent=0 // pred_region
    _
  $region21: #{upblock_forward.1} parent=0 // pred_fallthru
    _
  // Predicated region
  $region22: #{upblock_forward.1} parent=0 // pred_check
    _
  $region23: #{upblock_forward.1} parent=0 // pred_check_branch
    %22 = sbr.rel (0) target = $region25
  $region24: #{upblock_forward.1} parent=0 // pred_region
    _
  $region25: #{upblock_forward.1} parent=0 // pred_fallthru
    _
  %v24 = vld [vmem:[%s0] sm:$0xf]
  %v25 = vld [vmem:[%s0 + $0x4] sm:$0xf]
  %v26 = vld [vmem:[%s1] sm:$0xff]
  %v27 = vld [vmem:[%s1 + $0x8] sm:$0xff]
  %v28 = vld [vmem:[%s1 + $0x10] sm:$0xff]
  %v29 = vld [vmem:[%s1 + $0x18] sm:$0xff]
  %v30 = vld [vmem:[%s1 + $0x20] sm:$0xff]
  %v31 = vld [vmem:[%s1 + $0x28] sm:$0xff]
  %v32 = vld [vmem:[%s1 + $0x30] sm:$0xff]
  %v33 = vld [vmem:[%s1 + $0x38] sm:$0xff]
  %v34 = vld [vmem:[%s1 + $0x40] sm:$0xff]
  %v35 = vld [vmem:[%s1 + $0x48] sm:$0xff]
  %v36 = vld [vmem:[%s1 + $0x50] sm:$0xff]
  %v37 = vld [vmem:[%s1 + $0x58] sm:$0xff]
  %v40 = vunpack.c.l.b16 %v24
  %v41 = vunpack.c.l.b16 %v25
  %v42 = vpack.c.b16 %v41, %v40
  %v55 = vunpack.c.l.b16 %v26
  %v56 = vunpack.c.h.b16 %v26
  %v57 = vunpack.c.l.b16 %v27
  %v58 = vunpack.c.h.b16 %v27
  %v59 = vunpack.c.l.b16 %v28
  %v60 = vunpack.c.h.b16 %v28
  %v61 = vunpack.c.l.b16 %v29
  %v62 = vunpack.c.h.b16 %v29
  %v63 = vunpack.c.l.b16 %v30
  %v64 = vunpack.c.h.b16 %v30
  %v65 = vunpack.c.l.b16 %v31
  %v66 = vunpack.c.h.b16 %v31
  %v67 = vunpack.c.l.b16 %v32
  %v68 = vunpack.c.h.b16 %v32
  %v69 = vunpack.c.l.b16 %v33
  %v70 = vunpack.c.h.b16 %v33
  %v71 = vunpack.c.l.b16 %v34
  %v72 = vunpack.c.h.b16 %v34
  %v73 = vunpack.c.l.b16 %v35
  %v74 = vunpack.c.h.b16 %v35
  %v75 = vunpack.c.l.b16 %v36
  %v76 = vunpack.c.h.b16 %v36
  %v77 = vunpack.c.l.b16 %v37
  %v78 = vunpack.c.h.b16 %v37
  %v79 = vpack.c.b16 %v57, %v55
  %v80 = vpack.c.b16 %v58, %v56
  %v81 = vpack.c.b16 %v61, %v59
  %v82 = vpack.c.b16 %v62, %v60
  %v83 = vpack.c.b16 %v65, %v63
  %v84 = vpack.c.b16 %v66, %v64
  %v85 = vpack.c.b16 %v69, %v67
  %v86 = vpack.c.b16 %v70, %v68
  %v87 = vpack.c.b16 %v73, %v71
  %v88 = vpack.c.b16 %v74, %v72
  %v89 = vpack.c.b16 %v77, %v75
  %v90 = vpack.c.b16 %v78, %v76
  %vm103 = vcmask 785408
  %v105 = vsel %vm103, %v42, 0
  %107 = vmatprep.subr.bf16.mxu0 %v80
  %108 = vmatpush1.bf16.msra.mxu0 %v79
  %109 = vmatprep.subr.bf16.mxu0 %v82
  %110 = vmatpush1.bf16.msra.mxu0 %v81
  %111 = vmatprep.subr.bf16.mxu0 %v84
  %112 = vmatpush1.bf16.msra.mxu0 %v83
  %113 = vmatprep.subr.bf16.mxu0 %v86
  %114 = vmatpush1.bf16.msra.mxu0 %v85
  %115 = vmatprep.subr.bf16.mxu0 %v88
  %116 = vmatpush1.bf16.msra.mxu0 %v87
  %117 = vmatprep.subr.bf16.mxu0 %v90
  %118 = vmatpush1.bf16.msra.mxu0 %v89
  %119 = vmatprep.subr.bf16.mxu0 0
  %120 = vmatpush1.bf16.msra.mxu0 0
  %121 = vmatprep.subr.bf16.mxu0 0
  %122 = vmatpush1.bf16.msra.mxu0 0
  %123 = vmatprep.subr.bf16.mxu0 0
  %124 = vmatpush1.bf16.msra.mxu0 0
  %125 = vmatprep.subr.bf16.mxu0 0
  %126 = vmatpush1.bf16.msra.mxu0 0
  %127 = vmatprep.subr.bf16.mxu0 0
  %128 = vmatpush1.bf16.msra.mxu0 0
  %129 = vmatprep.subr.bf16.mxu0 0
  %130 = vmatpush1.bf16.msra.mxu0 0
  %131 = vmatprep.subr.bf16.mxu0 0
  %132 = vmatpush1.bf16.msra.mxu0 0
  %133 = vmatprep.subr.bf16.mxu0 0
  %134 = vmatpush1.bf16.msra.mxu0 0
  %135 = vmatprep.subr.bf16.mxu0 0
  %136 = vmatpush1.bf16.msra.mxu0 0
  %137 = vmatprep.subr.bf16.mxu0 0
  %138 = vmatpush1.bf16.msra.mxu0 0
  %139 = vmatprep.mubr.bf16.mxu0 0
  %140 = vmatmul.mubr.bf16.gmra.mrb[0].mxu0 %v105
  %v141 = vpop.f32.mrb[0].mxu0
  %v142 = vadd.f32 0.0, %v141
  %v143 = vpop.f32.mrb[0].mxu0
  %v144 = vadd.f32 0.0, %v143
  %v145 = vpop.f32.mrb[0].mxu0
  %v146 = vadd.f32 0.0, %v145
  %v147 = vpop.f32.mrb[0].mxu0
  %v148 = vadd.f32 0.0, %v147
  %149 = vdwg.mxu0
  %v150 = vadd.f32 %v142, %v146
  %v151 = vrot.slane %v150, 4
  %v152 = vadd.f32 %v150, %v151
  %v153 = vrot.slane %v152, 2
  %v154 = vadd.f32 %v152, %v153
  %v155 = vrot.slane %v154, 1
  %v156 = vadd.f32 %v154, %v155
  %v157 = vadd.f32 %v144, %v148
  %v158 = vrot.slane %v157, 4
  %v159 = vadd.f32 %v157, %v158
  %v160 = vrot.slane %v159, 2
  %v161 = vadd.f32 %v159, %v160
  %v162 = vrot.slane %v161, 1
  %v163 = vadd.f32 %v161, %v162
  %v164 = vld [vmem:[%s3] sm:$0xff]
  %v165 = vld [vmem:[%s3 + $0x8] sm:$0xff]
  %v166 = vld [vmem:[%s3 + $0x10] sm:$0xff]
  %v167 = vld [vmem:[%s3 + $0x18] sm:$0xff]
  %v168 = vld [vmem:[%s3 + $0x20] sm:$0xff]
  %v169 = vld [vmem:[%s3 + $0x28] sm:$0xff]
  %v170 = vld [vmem:[%s3 + $0x30] sm:$0xff]
  %v171 = vld [vmem:[%s3 + $0x38] sm:$0xff]
  %v172 = vld [vmem:[%s3 + $0x40] sm:$0xff]
  %v173 = vld [vmem:[%s3 + $0x48] sm:$0xff]
  %v174 = vld [vmem:[%s3 + $0x50] sm:$0xff]
  %v175 = vld [vmem:[%s3 + $0x58] sm:$0xff]
  %v176 = vld [vmem:[%s3 + $0x60] sm:$0xff]
  %v177 = vld [vmem:[%s3 + $0x68] sm:$0xff]
  %v178 = vld [vmem:[%s3 + $0x70] sm:$0xff]
  %v179 = vld [vmem:[%s3 + $0x78] sm:$0xff]
  %v180 = vld [vmem:[%s3 + $0x80] sm:$0xff]
  %v181 = vld [vmem:[%s3 + $0x88] sm:$0xff]
  %v182 = vld [vmem:[%s3 + $0x90] sm:$0xff]
  %v183 = vld [vmem:[%s3 + $0x98] sm:$0xff]
  %v184 = vld [vmem:[%s3 + $0xa0] sm:$0xff]
  %v185 = vld [vmem:[%s3 + $0xa8] sm:$0xff]
  %v186 = vld [vmem:[%s3 + $0xb0] sm:$0xff]
  %v187 = vld [vmem:[%s3 + $0xb8] sm:$0xff]
  %v188 = vld [vmem:[%s3 + $0xc0] sm:$0xff]
  %v189 = vld [vmem:[%s3 + $0xc8] sm:$0xff]
  %v190 = vld [vmem:[%s3 + $0xd0] sm:$0xff]
  %v191 = vld [vmem:[%s3 + $0xd8] sm:$0xff]
  %v192 = vld [vmem:[%s3 + $0xe0] sm:$0xff]
  %v193 = vld [vmem:[%s3 + $0xe8] sm:$0xff]
  %v194 = vld [vmem:[%s3 + $0xf0] sm:$0xff]
  %v195 = vld [vmem:[%s3 + $0xf8] sm:$0xff]
  %196 = vmatprep.subr.mxu0 0.0
  %197 = vmatpush1.msra.mxu0 %v164
  %198 = vmatprep.subr.mxu0 0.0
  %199 = vmatpush1.msra.mxu0 %v165
  %200 = vmatprep.subr.mxu0 0.0
  %201 = vmatpush1.msra.mxu0 %v166
  %202 = vmatprep.subr.mxu0 0.0
  %203 = vmatpush1.msra.mxu0 %v167
  %204 = vmatprep.subr.mxu0 0.0
  %205 = vmatpush1.msra.mxu0 %v168
  %206 = vmatprep.subr.mxu0 0.0
  %207 = vmatpush1.msra.mxu0 %v169
  %208 = vmatprep.subr.mxu0 0.0
  %209 = vmatpush1.msra.mxu0 %v170
  %210 = vmatprep.subr.mxu0 0.0
  %211 = vmatpush1.msra.mxu0 %v171
  %212 = vmatprep.subr.mxu0 0.0
  %213 = vmatpush1.msra.mxu0 %v172
  %214 = vmatprep.subr.mxu0 0.0
  %215 = vmatpush1.msra.mxu0 %v173
  %216 = vmatprep.subr.mxu0 0.0
  %217 = vmatpush1.msra.mxu0 %v174
  %218 = vmatprep.subr.mxu0 0.0
  %219 = vmatpush1.msra.mxu0 %v175
  %220 = vmatprep.subr.mxu0 0.0
  %221 = vmatpush1.msra.mxu0 %v176
  %222 = vmatprep.subr.mxu0 0.0
  %223 = vmatpush1.msra.mxu0 %v177
  %224 = vmatprep.subr.mxu0 0.0
  %225 = vmatpush1.msra.mxu0 %v178
  %226 = vmatprep.subr.mxu0 0.0
  %227 = vmatpush1.msra.mxu0 %v179
  %228 = vmatprep.subr.mxu0 0.0
  %229 = vmatpush1.msra.mxu0 %v180
  %230 = vmatprep.subr.mxu0 0.0
  %231 = vmatpush1.msra.mxu0 %v181
  %232 = vmatprep.subr.mxu0 0.0
  %233 = vmatpush1.msra.mxu0 %v182
  %234 = vmatprep.subr.mxu0 0.0
  %235 = vmatpush1.msra.mxu0 %v183
  %236 = vmatprep.subr.mxu0 0.0
  %237 = vmatpush1.msra.mxu0 %v184
  %238 = vmatprep.subr.mxu0 0.0
  %239 = vmatpush1.msra.mxu0 %v185
  %240 = vmatprep.subr.mxu0 0.0
  %241 = vmatpush1.msra.mxu0 %v186
  %242 = vmatprep.subr.mxu0 0.0
  %243 = vmatpush1.msra.mxu0 %v187
  %244 = vmatprep.subr.mxu0 0.0
  %245 = vmatpush1.msra.mxu0 %v188
  %246 = vmatprep.subr.mxu0 0.0
  %247 = vmatpush1.msra.mxu0 %v189
  %248 = vmatprep.subr.mxu0 0.0
  %249 = vmatpush1.msra.mxu0 %v190
  %250 = vmatprep.subr.mxu0 0.0
  %251 = vmatpush1.msra.mxu0 %v191
  %252 = vmatprep.subr.mxu0 0.0
  %253 = vmatpush1.msra.mxu0 %v192
  %254 = vmatprep.subr.mxu0 0.0
  %255 = vmatpush1.msra.mxu0 %v193
  %256 = vmatprep.subr.mxu0 0.0
  %257 = vmatpush1.msra.mxu0 %v194
  %258 = vmatprep.subr.mxu0 0.0
  %259 = vmatpush1.msra.mxu0 %v195
  %260 = vmatprep.mubr.f32.mxu0 %v163
  %261 = vmatmul.mubr.f32.gmra.mrb[0].mxu0 %v156
  %v262 = vpop.f32.mrb[0].mxu0
  %v263 = vadd.f32 0.0, %v262
  %v264 = vpop.f32.mrb[0].mxu0
  %265 = vdwg.mxu0
  %v266 = vmul.f32 %v263, 0.001953125
  %v267 = vld [vmem:[%s4] sm:$0xff]
  %v268 = vld [vmem:[%s4 + $0x8] sm:$0xff]
  %vm269 = vcmask 64512
  %v271 = vsel %vm269, %v266, 0
  %273 = vmatprep.subr.mxu0 %v268
  %274 = vmatpush1.msra.mxu0 %v267
  %275 = vmatprep.subr.mxu0 0.0
  %276 = vmatpush1.msra.mxu0 0.0
  %277 = vmatprep.subr.mxu0 0.0
  %278 = vmatpush1.msra.mxu0 0.0
  %279 = vmatprep.subr.mxu0 0.0
  %280 = vmatpush1.msra.mxu0 0.0
  %281 = vmatprep.subr.mxu0 0.0
  %282 = vmatpush1.msra.mxu0 0.0
  %283 = vmatprep.subr.mxu0 0.0
  %284 = vmatpush1.msra.mxu0 0.0
  %285 = vmatprep.subr.mxu0 0.0
  %286 = vmatpush1.msra.mxu0 0.0
  %287 = vmatprep.subr.mxu0 0.0
  %288 = vmatpush1.msra.mxu0 0.0
  %289 = vmatprep.subr.mxu0 0.0
  %290 = vmatpush1.msra.mxu0 0.0
  %291 = vmatprep.subr.mxu0 0.0
  %292 = vmatpush1.msra.mxu0 0.0
  %293 = vmatprep.subr.mxu0 0.0
  %294 = vmatpush1.msra.mxu0 0.0
  %295 = vmatprep.subr.mxu0 0.0
  %296 = vmatpush1.msra.mxu0 0.0
  %297 = vmatprep.subr.mxu0 0.0
  %298 = vmatpush1.msra.mxu0 0.0
  %299 = vmatprep.subr.mxu0 0.0
  %300 = vmatpush1.msra.mxu0 0.0
  %301 = vmatprep.subr.mxu0 0.0
  %302 = vmatpush1.msra.mxu0 0.0
  %303 = vmatprep.subr.mxu0 0.0
  %304 = vmatpush1.msra.mxu0 0.0
  %305 = vmatprep.subr.mxu0 0.0
  %306 = vmatpush1.msra.mxu0 0.0
  %307 = vmatprep.subr.mxu0 0.0
  %308 = vmatpush1.msra.mxu0 0.0
  %309 = vmatprep.subr.mxu0 0.0
  %310 = vmatpush1.msra.mxu0 0.0
  %311 = vmatprep.subr.mxu0 0.0
  %312 = vmatpush1.msra.mxu0 0.0
  %313 = vmatprep.subr.mxu0 0.0
  %314 = vmatpush1.msra.mxu0 0.0
  %315 = vmatprep.subr.mxu0 0.0
  %316 = vmatpush1.msra.mxu0 0.0
  %317 = vmatprep.subr.mxu0 0.0
  %318 = vmatpush1.msra.mxu0 0.0
  %319 = vmatprep.subr.mxu0 0.0
  %320 = vmatpush1.msra.mxu0 0.0
  %321 = vmatprep.subr.mxu0 0.0
  %322 = vmatpush1.msra.mxu0 0.0
  %323 = vmatprep.subr.mxu0 0.0
  %324 = vmatpush1.msra.mxu0 0.0
  %325 = vmatprep.subr.mxu0 0.0
  %326 = vmatpush1.msra.mxu0 0.0
  %327 = vmatprep.subr.mxu0 0.0
  %328 = vmatpush1.msra.mxu0 0.0
  %329 = vmatprep.subr.mxu0 0.0
  %330 = vmatpush1.msra.mxu0 0.0
  %331 = vmatprep.subr.mxu0 0.0
  %332 = vmatpush1.msra.mxu0 0.0
  %333 = vmatprep.subr.mxu0 0.0
  %334 = vmatpush1.msra.mxu0 0.0
  %335 = vmatprep.subr.mxu0 0.0
  %336 = vmatpush1.msra.mxu0 0.0
  %337 = vmatprep.mubr.f32.mxu0 0.0
  %338 = vmatmul.mubr.f32.gmra.mrb[0].mxu0 %v271
  %v339 = vpop.f32.mrb[0].mxu0
  %v340 = vadd.f32 0.0, %v339
  %v341 = vpop.f32.mrb[0].mxu0
  %v342 = vadd.f32 0.0, %v341
  %343 = vdwg.mxu0
  %v344 = vlaneseq
  %v345 = vshrl.u32 %v344, 7
  %v346 = vsub.s32 0, %v345
  %v347 = vrot.slane %v340, %v346
  %v348 = vlaneseq
  %v349 = vshrl.u32 %v348, 7
  %v350 = vsub.s32 0, %v349
  %v351 = vrot.slane %v342, %v350
  %v352 = vsub.f32 %v142, %v347
  %v353 = vsub.f32 %v144, %v351
  %v354 = vsub.f32 %v146, %v347
  %v355 = vsub.f32 %v148, %v351
  %v356 = vmul.f32 %v352, %v352
  %v357 = vmul.f32 %v353, %v353
  %v358 = vmul.f32 %v354, %v354
  %v359 = vmul.f32 %v355, %v355
  %v360 = vadd.f32 %v356, %v358
  %v361 = vrot.slane %v360, 4
  %v362 = vadd.f32 %v360, %v361
  %v363 = vrot.slane %v362, 2
  %v364 = vadd.f32 %v362, %v363
  %v365 = vrot.slane %v364, 1
  %v366 = vadd.f32 %v364, %v365
  %v367 = vadd.f32 %v357, %v359
  %v368 = vrot.slane %v367, 4
  %v369 = vadd.f32 %v367, %v368
  %v370 = vrot.slane %v369, 2
  %v371 = vadd.f32 %v369, %v370
  %v372 = vrot.slane %v371, 1
  %v373 = vadd.f32 %v371, %v372
  %374 = vmatprep.subr.mxu0 0.0
  %375 = vmatpush1.msra.mxu0 %v164
  %376 = vmatprep.subr.mxu0 0.0
  %377 = vmatpush1.msra.mxu0 %v165
  %378 = vmatprep.subr.mxu0 0.0
  %379 = vmatpush1.msra.mxu0 %v166
  %380 = vmatprep.subr.mxu0 0.0
  %381 = vmatpush1.msra.mxu0 %v167
  %382 = vmatprep.subr.mxu0 0.0
  %383 = vmatpush1.msra.mxu0 %v168
  %384 = vmatprep.subr.mxu0 0.0
  %385 = vmatpush1.msra.mxu0 %v169
  %386 = vmatprep.subr.mxu0 0.0
  %387 = vmatpush1.msra.mxu0 %v170
  %388 = vmatprep.subr.mxu0 0.0
  %389 = vmatpush1.msra.mxu0 %v171
  %390 = vmatprep.subr.mxu0 0.0
  %391 = vmatpush1.msra.mxu0 %v172
  %392 = vmatprep.subr.mxu0 0.0
  %393 = vmatpush1.msra.mxu0 %v173
  %394 = vmatprep.subr.mxu0 0.0
  %395 = vmatpush1.msra.mxu0 %v174
  %396 = vmatprep.subr.mxu0 0.0
  %397 = vmatpush1.msra.mxu0 %v175
  %398 = vmatprep.subr.mxu0 0.0
  %399 = vmatpush1.msra.mxu0 %v176
  %400 = vmatprep.subr.mxu0 0.0
  %401 = vmatpush1.msra.mxu0 %v177
  %402 = vmatprep.subr.mxu0 0.0
  %403 = vmatpush1.msra.mxu0 %v178
  %404 = vmatprep.subr.mxu0 0.0
  %405 = vmatpush1.msra.mxu0 %v179
  %406 = vmatprep.subr.mxu0 0.0
  %407 = vmatpush1.msra.mxu0 %v180
  %408 = vmatprep.subr.mxu0 0.0
  %409 = vmatpush1.msra.mxu0 %v181
  %410 = vmatprep.subr.mxu0 0.0
  %411 = vmatpush1.msra.mxu0 %v182
  %412 = vmatprep.subr.mxu0 0.0
  %413 = vmatpush1.msra.mxu0 %v183
  %414 = vmatprep.subr.mxu0 0.0
  %415 = vmatpush1.msra.mxu0 %v184
  %416 = vmatprep.subr.mxu0 0.0
  %417 = vmatpush1.msra.mxu0 %v185
  %418 = vmatprep.subr.mxu0 0.0
  %419 = vmatpush1.msra.mxu0 %v186
  %420 = vmatprep.subr.mxu0 0.0
  %421 = vmatpush1.msra.mxu0 %v187
  %422 = vmatprep.subr.mxu0 0.0
  %423 = vmatpush1.msra.mxu0 %v188
  %424 = vmatprep.subr.mxu0 0.0
  %425 = vmatpush1.msra.mxu0 %v189
  %426 = vmatprep.subr.mxu0 0.0
  %427 = vmatpush1.msra.mxu0 %v190
  %428 = vmatprep.subr.mxu0 0.0
  %429 = vmatpush1.msra.mxu0 %v191
  %430 = vmatprep.subr.mxu0 0.0
  %431 = vmatpush1.msra.mxu0 %v192
  %432 = vmatprep.subr.mxu0 0.0
  %433 = vmatpush1.msra.mxu0 %v193
  %434 = vmatprep.subr.mxu0 0.0
  %435 = vmatpush1.msra.mxu0 %v194
  %436 = vmatprep.subr.mxu0 0.0
  %437 = vmatpush1.msra.mxu0 %v195
  %438 = vmatprep.mubr.f32.mxu0 %v373
  %439 = vmatmul.mubr.f32.gmra.mrb[0].mxu0 %v366
  %v440 = vpop.f32.mrb[0].mxu0
  %v441 = vadd.f32 0.0, %v440
  %v442 = vpop.f32.mrb[0].mxu0
  %443 = vdwg.mxu0
  %v444 = vmul.f32 %v441, 0.001953125
  %v445 = vld [vmem:[%s5] sm:$0x1]
  %v446 = vadd.f32 %v444, 1e-05
  %v447 = vrsqrt.pop %v446
  %v448 = vmul.f32 %v445, %v447
  %v449 = vld [vmem:[%s5 + $0x1] sm:$0x1]
  %v450 = vmul.f32 %v266, %v448
  %v451 = vsub.f32 %v449, %v450
  %v453 = vrot.slane %v451, 7
  %vm455 = vcmask 1040384
  %v456 = vsel %vm455, %v448, %v453
  %v458 = vsel %vm269, %v456, 0
  %460 = vmatprep.subr.mxu0 %v268
  %461 = vmatpush1.msra.mxu0 %v267
  %462 = vmatprep.subr.mxu0 0.0
  %463 = vmatpush1.msra.mxu0 0.0
  %464 = vmatprep.subr.mxu0 0.0
  %465 = vmatpush1.msra.mxu0 0.0
  %466 = vmatprep.subr.mxu0 0.0
  %467 = vmatpush1.msra.mxu0 0.0
  %468 = vmatprep.subr.mxu0 0.0
  %469 = vmatpush1.msra.mxu0 0.0
  %470 = vmatprep.subr.mxu0 0.0
  %471 = vmatpush1.msra.mxu0 0.0
  %472 = vmatprep.subr.mxu0 0.0
  %473 = vmatpush1.msra.mxu0 0.0
  %474 = vmatprep.subr.mxu0 0.0
  %475 = vmatpush1.msra.mxu0 0.0
  %476 = vmatprep.subr.mxu0 0.0
  %477 = vmatpush1.msra.mxu0 0.0
  %478 = vmatprep.subr.mxu0 0.0
  %479 = vmatpush1.msra.mxu0 0.0
  %480 = vmatprep.subr.mxu0 0.0
  %481 = vmatpush1.msra.mxu0 0.0
  %482 = vmatprep.subr.mxu0 0.0
  %483 = vmatpush1.msra.mxu0 0.0
  %484 = vmatprep.subr.mxu0 0.0
  %485 = vmatpush1.msra.mxu0 0.0
  %486 = vmatprep.subr.mxu0 0.0
  %487 = vmatpush1.msra.mxu0 0.0
  %488 = vmatprep.subr.mxu0 0.0
  %489 = vmatpush1.msra.mxu0 0.0
  %490 = vmatprep.subr.mxu0 0.0
  %491 = vmatpush1.msra.mxu0 0.0
  %492 = vmatprep.subr.mxu0 0.0
  %493 = vmatpush1.msra.mxu0 0.0
  %494 = vmatprep.subr.mxu0 0.0
  %495 = vmatpush1.msra.mxu0 0.0
  %496 = vmatprep.subr.mxu0 0.0
  %497 = vmatpush1.msra.mxu0 0.0
  %498 = vmatprep.subr.mxu0 0.0
  %499 = vmatpush1.msra.mxu0 0.0
  %500 = vmatprep.subr.mxu0 0.0
  %501 = vmatpush1.msra.mxu0 0.0
  %502 = vmatprep.subr.mxu0 0.0
  %503 = vmatpush1.msra.mxu0 0.0
  %504 = vmatprep.subr.mxu0 0.0
  %505 = vmatpush1.msra.mxu0 0.0
  %506 = vmatprep.subr.mxu0 0.0
  %507 = vmatpush1.msra.mxu0 0.0
  %508 = vmatprep.subr.mxu0 0.0
  %509 = vmatpush1.msra.mxu0 0.0
  %510 = vmatprep.subr.mxu0 0.0
  %511 = vmatpush1.msra.mxu0 0.0
  %512 = vmatprep.subr.mxu0 0.0
  %513 = vmatpush1.msra.mxu0 0.0
  %514 = vmatprep.subr.mxu0 0.0
  %515 = vmatpush1.msra.mxu0 0.0
  %516 = vmatprep.subr.mxu0 0.0
  %517 = vmatpush1.msra.mxu0 0.0
  %518 = vmatprep.subr.mxu0 0.0
  %519 = vmatpush1.msra.mxu0 0.0
  %520 = vmatprep.subr.mxu0 0.0
  %521 = vmatpush1.msra.mxu0 0.0
  %522 = vmatprep.subr.mxu0 0.0
  %523 = vmatpush1.msra.mxu0 0.0
  %524 = vmatprep.mubr.f32.mxu0 0.0
  %525 = vmatmul.mubr.f32.gmra.mrb[0].mxu0 %v458
  %v526 = vpop.f32.mrb[0].mxu0
  %v527 = vadd.f32 0.0, %v526
  %v528 = vpop.f32.mrb[0].mxu0
  %v529 = vadd.f32 0.0, %v528
  %530 = vdwg.mxu0
  %v531 = vlaneseq
  %v532 = vshrl.u32 %v531, 7
  %v533 = vsub.s32 0, %v532
  %v534 = vrot.slane %v527, %v533
  %v535 = vlaneseq
  %v536 = vshrl.u32 %v535, 7
  %v537 = vsub.s32 0, %v536
  %v538 = vrot.slane %v529, %v537
  %v539 = vmul.f32 %v142, %v534
  %v540 = vmul.f32 %v144, %v538
  %v541 = vmul.f32 %v146, %v534
  %v542 = vmul.f32 %v148, %v538
  %v543 = vlaneseq
  %v544 = vshrl.u32 %v543, 7
  %v545 = vsub.s32 1, %v544
  %v546 = vrot.slane %v527, %v545
  %v547 = vlaneseq
  %v548 = vshrl.u32 %v547, 7
  %v549 = vsub.s32 1, %v548
  %v550 = vrot.slane %v529, %v549
  %v551 = vadd.f32 %v539, %v546
  %v552 = vadd.f32 %v540, %v550
  %v553 = vadd.f32 %v541, %v546
  %v554 = vadd.f32 %v542, %v550
  %v555 = vmax.f32 %v551, 0.0
  %v556 = vmax.f32 %v552, 0.0
  %v557 = vmax.f32 %v553, 0.0
  %v558 = vmax.f32 %v554, 0.0
  %v559 = vpack.c.bf16 %v557, %v555
  %v560 = vpack.c.bf16 %v558, %v556
  %vm561 = vcmask 1040384
  %vm562 = vsmask.f32 256
  %vm563 = vmand %vm561, %vm562
  %vm564 = vcmask 1044484
  %vm565 = vsmask.f32 4352
  %vm566 = vmand %vm564, %vm565
  %vm567 = vmor %vm566, %vm563
  %v568 = vld [vmem:[#allocation2] sm:$0x11]
  %v569 = vsel %vm567, 0, %v568
  %570 = vst [vmem:[#allocation2] sm:$0x11] %v569
  %v573 = vunpack.c.l.b16 %v559
  %v574 = vunpack.c.l.b16 %v560
  %v575 = vpack.c.b16 %v574, %v573
  %v577 = vshrl.u32 %v575, 16
  %v579 = vrot.slane %v577, 7
  %v580 = vshll.u32 %v575, 16
  %v582 = vor.u32 %v579, %v580
  %v583 = vrot.slane %v579, 4
  %vm586 = vcmask 1043456
  %vm587 = vsmask.f32 7938
  %vm588 = vmand %vm586, %vm587
  %vm589 = vcmask 1047556
  %vm590 = vsmask.f32 7954
  %vm591 = vmand %vm589, %vm590
  %vm592 = vmor %vm591, %vm588
  %v593 = vld [vmem:[#allocation2] sm:$0xff]
  %v594 = vsel %vm592, %v582, %v593
  %595 = vst [vmem:[#allocation2] sm:$0xff] %v594
  %v596 = vld [vmem:[#allocation2 + $0x8] sm:$0x11]
  %v597 = vsel %vm567, %v583, %v596
  %598 = vst [vmem:[#allocation2 + $0x8] sm:$0x11] %v597
  %vm599 = vmand %vm561, %vm587
  %vm600 = vmand %vm564, %vm590
  %vm601 = vmor %vm600, %vm599
  %v602 = vld [vmem:[#allocation2 + $0x8] sm:$0x11]
  %v603 = vsel %vm601, 0, %v602
  %604 = vst [vmem:[#allocation2 + $0x8] sm:$0x11] %v603
  %s605 = scalar_lea.vmem [#allocation2], 16
  %v606 = vld [vmem:[%s605] sm:$0x11]
  %v607 = vsel %vm567, 0, %v606
  %608 = vst [vmem:[%s605] sm:$0x11] %v607
  %v609 = vunpack.c.h.b16 %v559
  %v610 = vunpack.c.h.b16 %v560
  %v611 = vpack.c.b16 %v610, %v609
  %v613 = vshrl.u32 %v611, 16
  %v615 = vrot.slane %v613, 7
  %v616 = vshll.u32 %v611, 16
  %v618 = vor.u32 %v615, %v616
  %v619 = vrot.slane %v615, 4
  %v622 = vld [vmem:[%s605] sm:$0xff]
  %v623 = vsel %vm592, %v618, %v622
  %624 = vst [vmem:[%s605] sm:$0xff] %v623
  %v625 = vld [vmem:[%s605 + $0x8] sm:$0x11]
  %v626 = vsel %vm567, %v619, %v625
  %627 = vst [vmem:[%s605 + $0x8] sm:$0x11] %v626
  %v628 = vld [vmem:[%s605 + $0x8] sm:$0x11]
  %v629 = vsel %vm601, 0, %v628
  %630 = vst [vmem:[%s605 + $0x8] sm:$0x11] %v629
  %v631 = vld [vmem:[#allocation2 + $0x4] sm:$0xf]
  %v632 = vld [vmem:[#allocation2] sm:$0xff]
  %v633 = vld [vmem:[#allocation2 + $0x8] sm:$0x11]
  %v634 = vld [vmem:[#allocation2] sm:$0xe]
  %v635 = vld [vmem:[#allocation2 + $0x8] sm:$0x1]
  %v638 = vunpack.c.l.b16 %v632
  %v639 = vunpack.c.h.b16 %v632
  %v640 = vunpack.c.l.b16 %v633
  %v641 = vunpack.c.h.b16 %v633
  %v642 = vpack.c.b16 %v640, %v638
  %v643 = vpack.c.b16 %v641, %v639
  %v645 = vshrl.u32 %v642, 16
  %v647 = vshll.u32 %v642, 16
  %v649 = vrot.slane %v647, 1
  %v650 = vor.u32 %v645, %v649
  %v652 = vshrl.u32 %v643, 16
  %v654 = vshll.u32 %v643, 16
  %v656 = vrot.slane %v654, 1
  %v657 = vor.u32 %v652, %v656
  %v662 = vunpack.c.l.b16 %v634
  %v663 = vunpack.c.l.b16 %v635
  %v664 = vpack.c.b16 %v663, %v662
  %v665 = vrot.slane %v664, 1
  %v667 = vld [vmem:[%s2] sm:$0xff]
  %v668 = vld [vmem:[%s2 + $0x8] sm:$0xff]
  %v669 = vld [vmem:[%s2 + $0x10] sm:$0xff]
  %v670 = vld [vmem:[%s2 + $0x18] sm:$0xff]
  %v671 = vld [vmem:[%s2 + $0x20] sm:$0xff]
  %v672 = vld [vmem:[%s2 + $0x28] sm:$0xff]
  %v673 = vld [vmem:[%s2 + $0x30] sm:$0xff]
  %v674 = vld [vmem:[%s2 + $0x38] sm:$0xff]
  %v675 = vld [vmem:[%s2 + $0x40] sm:$0xff]
  %v676 = vld [vmem:[%s2 + $0x48] sm:$0xff]
  %v677 = vld [vmem:[%s2 + $0x50] sm:$0xff]
  %v678 = vld [vmem:[%s2 + $0x58] sm:$0xff]
  %v679 = vld [vmem:[%s2 + $0x60] sm:$0xff]
  %v680 = vld [vmem:[%s2 + $0x68] sm:$0xff]
  %v681 = vld [vmem:[%s2 + $0x70] sm:$0xff]
  %v682 = vld [vmem:[%s2 + $0x78] sm:$0xff]
  %v683 = vld [vmem:[%s2 + $0x80] sm:$0xff]
  %v684 = vld [vmem:[%s2 + $0x88] sm:$0xff]
  %v685 = vld [vmem:[%s2 + $0x90] sm:$0xff]
  %v686 = vld [vmem:[%s2 + $0x98] sm:$0xff]
  %v687 = vld [vmem:[%s2 + $0xa0] sm:$0xff]
  %v688 = vld [vmem:[%s2 + $0xa8] sm:$0xff]
  %v689 = vld [vmem:[%s2 + $0xb0] sm:$0xff]
  %v690 = vld [vmem:[%s2 + $0xb8] sm:$0xff]
  %v691 = vld [vmem:[%s2 + $0xc0] sm:$0xff]
  %v692 = vld [vmem:[%s2 + $0xc8] sm:$0xff]
  %v693 = vld [vmem:[%s2 + $0xd0] sm:$0xff]
  %v694 = vld [vmem:[%s2 + $0xd8] sm:$0xff]
  %v695 = vld [vmem:[%s2 + $0xe0] sm:$0xff]
  %v696 = vld [vmem:[%s2 + $0xe8] sm:$0xff]
  %v697 = vld [vmem:[%s2 + $0xf0] sm:$0xff]
  %v698 = vld [vmem:[%s2 + $0xf8] sm:$0xff]
  %v699 = vld [vmem:[%s2 + $0x100] sm:$0xff]
  %v700 = vld [vmem:[%s2 + $0x108] sm:$0xff]
  %v701 = vld [vmem:[%s2 + $0x110] sm:$0xff]
  %v702 = vld [vmem:[%s2 + $0x118] sm:$0xff]
  %v703 = vld [vmem:[%s2 + $0x120] sm:$0xff]
  %v704 = vld [vmem:[%s2 + $0x128] sm:$0xff]
  %v705 = vld [vmem:[%s2 + $0x130] sm:$0xff]
  %v706 = vld [vmem:[%s2 + $0x138] sm:$0xff]
  %v707 = vld [vmem:[%s2 + $0x140] sm:$0xff]
  %v708 = vld [vmem:[%s2 + $0x148] sm:$0xff]
  %v709 = vld [vmem:[%s2 + $0x150] sm:$0xff]
  %v710 = vld [vmem:[%s2 + $0x158] sm:$0xff]
  %v711 = vld [vmem:[%s2 + $0x160] sm:$0xff]
  %v712 = vld [vmem:[%s2 + $0x168] sm:$0xff]
  %v713 = vld [vmem:[%s2 + $0x170] sm:$0xff]
  %v714 = vld [vmem:[%s2 + $0x178] sm:$0xff]
  %v715 = vld [vmem:[%s2 + $0x180] sm:$0xff]
  %v716 = vld [vmem:[%s2 + $0x188] sm:$0xff]
  %v717 = vld [vmem:[%s2 + $0x190] sm:$0xff]
  %v718 = vld [vmem:[%s2 + $0x198] sm:$0xff]
  %v719 = vld [vmem:[%s2 + $0x1a0] sm:$0xff]
  %v720 = vld [vmem:[%s2 + $0x1a8] sm:$0xff]
  %v721 = vld [vmem:[%s2 + $0x1b0] sm:$0xff]
  %v722 = vld [vmem:[%s2 + $0x1b8] sm:$0xff]
  %v723 = vld [vmem:[%s2 + $0x1c0] sm:$0xff]
  %v724 = vld [vmem:[%s2 + $0x1c8] sm:$0xff]
  %v725 = vld [vmem:[%s2 + $0x1d0] sm:$0xff]
  %v726 = vld [vmem:[%s2 + $0x1d8] sm:$0xff]
  %v727 = vld [vmem:[%s2 + $0x1e0] sm:$0xff]
  %v728 = vld [vmem:[%s2 + $0x1e8] sm:$0xff]
  %v729 = vld [vmem:[%s2 + $0x1f0] sm:$0xff]
  %v730 = vld [vmem:[%s2 + $0x1f8] sm:$0xff]
  %v795 = vunpack.c.l.b16 %v667
  %v796 = vunpack.c.h.b16 %v667
  %v797 = vunpack.c.l.b16 %v668
  %v798 = vunpack.c.h.b16 %v668
  %v799 = vunpack.c.l.b16 %v669
  %v800 = vunpack.c.h.b16 %v669
  %v801 = vunpack.c.l.b16 %v670
  %v802 = vunpack.c.h.b16 %v670
  %v803 = vunpack.c.l.b16 %v671
  %v804 = vunpack.c.h.b16 %v671
  %v805 = vunpack.c.l.b16 %v672
  %v806 = vunpack.c.h.b16 %v672
  %v807 = vunpack.c.l.b16 %v673
  %v808 = vunpack.c.h.b16 %v673
  %v809 = vunpack.c.l.b16 %v674
  %v810 = vunpack.c.h.b16 %v674
  %v811 = vunpack.c.l.b16 %v675
  %v812 = vunpack.c.h.b16 %v675
  %v813 = vunpack.c.l.b16 %v676
  %v814 = vunpack.c.h.b16 %v676
  %v815 = vunpack.c.l.b16 %v677
  %v816 = vunpack.c.h.b16 %v677
  %v817 = vunpack.c.l.b16 %v678
  %v818 = vunpack.c.h.b16 %v678
  %v819 = vunpack.c.l.b16 %v679
  %v820 = vunpack.c.h.b16 %v679
  %v821 = vunpack.c.l.b16 %v680
  %v822 = vunpack.c.h.b16 %v680
  %v823 = vunpack.c.l.b16 %v681
  %v824 = vunpack.c.h.b16 %v681
  %v825 = vunpack.c.l.b16 %v682
  %v826 = vunpack.c.h.b16 %v682
  %v827 = vunpack.c.l.b16 %v683
  %v828 = vunpack.c.h.b16 %v683
  %v829 = vunpack.c.l.b16 %v684
  %v830 = vunpack.c.h.b16 %v684
  %v831 = vunpack.c.l.b16 %v685
  %v832 = vunpack.c.h.b16 %v685
  %v833 = vunpack.c.l.b16 %v686
  %v834 = vunpack.c.h.b16 %v686
  %v835 = vunpack.c.l.b16 %v687
  %v836 = vunpack.c.h.b16 %v687
  %v837 = vunpack.c.l.b16 %v688
  %v838 = vunpack.c.h.b16 %v688
  %v839 = vunpack.c.l.b16 %v689
  %v840 = vunpack.c.h.b16 %v689
  %v841 = vunpack.c.l.b16 %v690
  %v842 = vunpack.c.h.b16 %v690
  %v843 = vunpack.c.l.b16 %v691
  %v844 = vunpack.c.h.b16 %v691
  %v845 = vunpack.c.l.b16 %v692
  %v846 = vunpack.c.h.b16 %v692
  %v847 = vunpack.c.l.b16 %v693
  %v848 = vunpack.c.h.b16 %v693
  %v849 = vunpack.c.l.b16 %v694
  %v850 = vunpack.c.h.b16 %v694
  %v851 = vunpack.c.l.b16 %v695
  %v852 = vunpack.c.h.b16 %v695
  %v853 = vunpack.c.l.b16 %v696
  %v854 = vunpack.c.h.b16 %v696
  %v855 = vunpack.c.l.b16 %v697
  %v856 = vunpack.c.h.b16 %v697
  %v857 = vunpack.c.l.b16 %v698
  %v858 = vunpack.c.h.b16 %v698
  %v859 = vunpack.c.l.b16 %v699
  %v860 = vunpack.c.h.b16 %v699
  %v861 = vunpack.c.l.b16 %v700
  %v862 = vunpack.c.h.b16 %v700
  %v863 = vunpack.c.l.b16 %v701
  %v864 = vunpack.c.h.b16 %v701
  %v865 = vunpack.c.l.b16 %v702
  %v866 = vunpack.c.h.b16 %v702
  %v867 = vunpack.c.l.b16 %v703
  %v868 = vunpack.c.h.b16 %v703
  %v869 = vunpack.c.l.b16 %v704
  %v870 = vunpack.c.h.b16 %v704
  %v871 = vunpack.c.l.b16 %v705
  %v872 = vunpack.c.h.b16 %v705
  %v873 = vunpack.c.l.b16 %v706
  %v874 = vunpack.c.h.b16 %v706
  %v875 = vunpack.c.l.b16 %v707
  %v876 = vunpack.c.h.b16 %v707
  %v877 = vunpack.c.l.b16 %v708
  %v878 = vunpack.c.h.b16 %v708
  %v879 = vunpack.c.l.b16 %v709
  %v880 = vunpack.c.h.b16 %v709
  %v881 = vunpack.c.l.b16 %v710
  %v882 = vunpack.c.h.b16 %v710
  %v883 = vunpack.c.l.b16 %v711
  %v884 = vunpack.c.h.b16 %v711
  %v885 = vunpack.c.l.b16 %v712
  %v886 = vunpack.c.h.b16 %v712
  %v887 = vunpack.c.l.b16 %v713
  %v888 = vunpack.c.h.b16 %v713
  %v889 = vunpack.c.l.b16 %v714
  %v890 = vunpack.c.h.b16 %v714
  %v891 = vunpack.c.l.b16 %v715
  %v892 = vunpack.c.h.b16 %v715
  %v893 = vunpack.c.l.b16 %v716
  %v894 = vunpack.c.h.b16 %v716
  %v895 = vunpack.c.l.b16 %v717
  %v896 = vunpack.c.h.b16 %v717
  %v897 = vunpack.c.l.b16 %v718
  %v898 = vunpack.c.h.b16 %v718
  %v899 = vunpack.c.l.b16 %v719
  %v900 = vunpack.c.h.b16 %v719
  %v901 = vunpack.c.l.b16 %v720
  %v902 = vunpack.c.h.b16 %v720
  %v903 = vunpack.c.l.b16 %v721
  %v904 = vunpack.c.h.b16 %v721
  %v905 = vunpack.c.l.b16 %v722
  %v906 = vunpack.c.h.b16 %v722
  %v907 = vunpack.c.l.b16 %v723
  %v908 = vunpack.c.h.b16 %v723
  %v909 = vunpack.c.l.b16 %v724
  %v910 = vunpack.c.h.b16 %v724
  %v911 = vunpack.c.l.b16 %v725
  %v912 = vunpack.c.h.b16 %v725
  %v913 = vunpack.c.l.b16 %v726
  %v914 = vunpack.c.h.b16 %v726
  %v915 = vunpack.c.l.b16 %v727
  %v916 = vunpack.c.h.b16 %v727
  %v917 = vunpack.c.l.b16 %v728
  %v918 = vunpack.c.h.b16 %v728
  %v919 = vunpack.c.l.b16 %v729
  %v920 = vunpack.c.h.b16 %v729
  %v921 = vunpack.c.l.b16 %v730
  %v922 = vunpack.c.h.b16 %v730
  %v923 = vpack.c.b16 %v797, %v795
  %v924 = vpack.c.b16 %v798, %v796
  %v925 = vpack.c.b16 %v801, %v799
  %v926 = vpack.c.b16 %v802, %v800
  %v927 = vpack.c.b16 %v805, %v803
  %v928 = vpack.c.b16 %v806, %v804
  %v929 = vpack.c.b16 %v809, %v807
  %v930 = vpack.c.b16 %v810, %v808
  %v931 = vpack.c.b16 %v813, %v811
  %v932 = vpack.c.b16 %v814, %v812
  %v933 = vpack.c.b16 %v817, %v815
  %v934 = vpack.c.b16 %v818, %v816
  %v935 = vpack.c.b16 %v821, %v819
  %v936 = vpack.c.b16 %v822, %v820
  %v937 = vpack.c.b16 %v825, %v823
  %v938 = vpack.c.b16 %v826, %v824
  %v939 = vpack.c.b16 %v829, %v827
  %v940 = vpack.c.b16 %v830, %v828
  %v941 = vpack.c.b16 %v833, %v831
  %v942 = vpack.c.b16 %v834, %v832
  %v943 = vpack.c.b16 %v837, %v835
  %v944 = vpack.c.b16 %v838, %v836
  %v945 = vpack.c.b16 %v841, %v839
  %v946 = vpack.c.b16 %v842, %v840
  %v947 = vpack.c.b16 %v845, %v843
  %v948 = vpack.c.b16 %v846, %v844
  %v949 = vpack.c.b16 %v849, %v847
  %v950 = vpack.c.b16 %v850, %v848
  %v951 = vpack.c.b16 %v853, %v851
  %v952 = vpack.c.b16 %v854, %v852
  %v953 = vpack.c.b16 %v857, %v855
  %v954 = vpack.c.b16 %v858, %v856
  %v955 = vpack.c.b16 %v861, %v859
  %v956 = vpack.c.b16 %v862, %v860
  %v957 = vpack.c.b16 %v865, %v863
  %v958 = vpack.c.b16 %v866, %v864
  %v959 = vpack.c.b16 %v869, %v867
  %v960 = vpack.c.b16 %v870, %v868
  %v961 = vpack.c.b16 %v873, %v871
  %v962 = vpack.c.b16 %v874, %v872
  %v963 = vpack.c.b16 %v877, %v875
  %v964 = vpack.c.b16 %v878, %v876
  %v965 = vpack.c.b16 %v881, %v879
  %v966 = vpack.c.b16 %v882, %v880
  %v967 = vpack.c.b16 %v885, %v883
  %v968 = vpack.c.b16 %v886, %v884
  %v969 = vpack.c.b16 %v889, %v887
  %v970 = vpack.c.b16 %v890, %v888
  %v971 = vpack.c.b16 %v893, %v891
  %v972 = vpack.c.b16 %v894, %v892
  %v973 = vpack.c.b16 %v897, %v895
  %v974 = vpack.c.b16 %v898, %v896
  %v975 = vpack.c.b16 %v901, %v899
  %v976 = vpack.c.b16 %v902, %v900
  %v977 = vpack.c.b16 %v905, %v903
  %v978 = vpack.c.b16 %v906, %v904
  %v979 = vpack.c.b16 %v909, %v907
  %v980 = vpack.c.b16 %v910, %v908
  %v981 = vpack.c.b16 %v913, %v911
  %v982 = vpack.c.b16 %v914, %v912
  %v983 = vpack.c.b16 %v917, %v915
  %v984 = vpack.c.b16 %v918, %v916
  %v985 = vpack.c.b16 %v921, %v919
  %v986 = vpack.c.b16 %v922, %v920
  %1051 = vmatprep.subr.bf16.mxu0 %v924
  %1052 = vmatpush1.bf16.msra.mxu0 %v923
  %1053 = vmatprep.subr.bf16.mxu0 %v926
  %1054 = vmatpush1.bf16.msra.mxu0 %v925
  %1055 = vmatprep.subr.bf16.mxu0 %v928
  %1056 = vmatpush1.bf16.msra.mxu0 %v927
  %1057 = vmatprep.subr.bf16.mxu0 %v930
  %1058 = vmatpush1.bf16.msra.mxu0 %v929
  %1059 = vmatprep.subr.bf16.mxu0 %v932
  %1060 = vmatpush1.bf16.msra.mxu0 %v931
  %1061 = vmatprep.subr.bf16.mxu0 %v934
  %1062 = vmatpush1.bf16.msra.mxu0 %v933
  %1063 = vmatprep.subr.bf16.mxu0 %v936
  %1064 = vmatpush1.bf16.msra.mxu0 %v935
  %1065 = vmatprep.subr.bf16.mxu0 %v938
  %1066 = vmatpush1.bf16.msra.mxu0 %v937
  %1067 = vmatprep.subr.bf16.mxu0 %v940
  %1068 = vmatpush1.bf16.msra.mxu0 %v939
  %1069 = vmatprep.subr.bf16.mxu0 %v942
  %1070 = vmatpush1.bf16.msra.mxu0 %v941
  %1071 = vmatprep.subr.bf16.mxu0 %v944
  %1072 = vmatpush1.bf16.msra.mxu0 %v943
  %1073 = vmatprep.subr.bf16.mxu0 %v946
  %1074 = vmatpush1.bf16.msra.mxu0 %v945
  %1075 = vmatprep.subr.bf16.mxu0 %v948
  %1076 = vmatpush1.bf16.msra.mxu0 %v947
  %1077 = vmatprep.subr.bf16.mxu0 %v950
  %1078 = vmatpush1.bf16.msra.mxu0 %v949
  %1079 = vmatprep.subr.bf16.mxu0 %v952
  %1080 = vmatpush1.bf16.msra.mxu0 %v951
  %1081 = vmatprep.subr.bf16.mxu0 %v954
  %1082 = vmatpush1.bf16.msra.mxu0 %v953
  %1083 = vmatprep.mubr.bf16.mxu0 %v650
  %1084 = vmatmul.mubr.bf16.gmra.mrb[0].mxu0 %v631
  %v1085 = vpop.f32.mrb[0].mxu0
  %v1086 = vadd.f32 0.0, %v1085
  %v1087 = vpop.f32.mrb[0].mxu0
  %v1088 = vadd.f32 0.0, %v1087
  %v1089 = vpop.f32.mrb[0].mxu0
  %v1090 = vpop.f32.mrb[0].mxu0
  %1091 = vdwg.mxu0
  %1092 = vmatprep.subr.bf16.mxu0 %v956
  %1093 = vmatpush1.bf16.msra.mxu0 %v955
  %1094 = vmatprep.subr.bf16.mxu0 %v958
  %1095 = vmatpush1.bf16.msra.mxu0 %v957
  %1096 = vmatprep.subr.bf16.mxu0 %v960
  %1097 = vmatpush1.bf16.msra.mxu0 %v959
  %1098 = vmatprep.subr.bf16.mxu0 %v962
  %1099 = vmatpush1.bf16.msra.mxu0 %v961
  %1100 = vmatprep.subr.bf16.mxu0 %v964
  %1101 = vmatpush1.bf16.msra.mxu0 %v963
  %1102 = vmatprep.subr.bf16.mxu0 %v966
  %1103 = vmatpush1.bf16.msra.mxu0 %v965
  %1104 = vmatprep.subr.bf16.mxu0 %v968
  %1105 = vmatpush1.bf16.msra.mxu0 %v967
  %1106 = vmatprep.subr.bf16.mxu0 %v970
  %1107 = vmatpush1.bf16.msra.mxu0 %v969
  %1108 = vmatprep.subr.bf16.mxu0 %v972
  %1109 = vmatpush1.bf16.msra.mxu0 %v971
  %1110 = vmatprep.subr.bf16.mxu0 %v974
  %1111 = vmatpush1.bf16.msra.mxu0 %v973
  %1112 = vmatprep.subr.bf16.mxu0 %v976
  %1113 = vmatpush1.bf16.msra.mxu0 %v975
  %1114 = vmatprep.subr.bf16.mxu0 %v978
  %1115 = vmatpush1.bf16.msra.mxu0 %v977
  %1116 = vmatprep.subr.bf16.mxu0 %v980
  %1117 = vmatpush1.bf16.msra.mxu0 %v979
  %1118 = vmatprep.subr.bf16.mxu0 %v982
  %1119 = vmatpush1.bf16.msra.mxu0 %v981
  %1120 = vmatprep.subr.bf16.mxu0 %v984
  %1121 = vmatpush1.bf16.msra.mxu0 %v983
  %1122 = vmatprep.subr.bf16.mxu0 %v986
  %1123 = vmatpush1.bf16.msra.mxu0 %v985
  %1124 = vmatprep.mubr.bf16.mxu0 %v665
  %1125 = vmatmul.mubr.bf16.gmra.mrb[0].mxu0 %v657
  %v1126 = vpop.f32.mrb[0].mxu0
  %v1127 = vadd.f32 %v1086, %v1126
  %v1128 = vpop.f32.mrb[0].mxu0
  %v1129 = vadd.f32 %v1088, %v1128
  %v1130 = vpop.f32.mrb[0].mxu0
  %v1131 = vpop.f32.mrb[0].mxu0
  %1132 = vdwg.mxu0
  %v1133 = vld [vmem:[%s605 + $0x4] sm:$0xf]
  %v1134 = vld [vmem:[%s605] sm:$0xff]
  %v1135 = vld [vmem:[%s605 + $0x8] sm:$0x11]
  %v1136 = vld [vmem:[%s605] sm:$0xe]
  %v1137 = vld [vmem:[%s605 + $0x8] sm:$0x1]
  %v1140 = vunpack.c.l.b16 %v1134
  %v1141 = vunpack.c.h.b16 %v1134
  %v1142 = vunpack.c.l.b16 %v1135
  %v1143 = vunpack.c.h.b16 %v1135
  %v1144 = vpack.c.b16 %v1142, %v1140
  %v1145 = vpack.c.b16 %v1143, %v1141
  %v1147 = vshrl.u32 %v1144, 16
  %v1149 = vshll.u32 %v1144, 16
  %v1151 = vrot.slane %v1149, 1
  %v1152 = vor.u32 %v1147, %v1151
  %v1154 = vshrl.u32 %v1145, 16
  %v1156 = vshll.u32 %v1145, 16
  %v1158 = vrot.slane %v1156, 1
  %v1159 = vor.u32 %v1154, %v1158
  %v1164 = vunpack.c.l.b16 %v1136
  %v1165 = vunpack.c.l.b16 %v1137
  %v1166 = vpack.c.b16 %v1165, %v1164
  %v1167 = vrot.slane %v1166, 1
  %1169 = vmatprep.subr.bf16.mxu0 %v924
  %1170 = vmatpush1.bf16.msra.mxu0 %v923
  %1171 = vmatprep.subr.bf16.mxu0 %v926
  %1172 = vmatpush1.bf16.msra.mxu0 %v925
  %1173 = vmatprep.subr.bf16.mxu0 %v928
  %1174 = vmatpush1.bf16.msra.mxu0 %v927
  %1175 = vmatprep.subr.bf16.mxu0 %v930
  %1176 = vmatpush1.bf16.msra.mxu0 %v929
  %1177 = vmatprep.subr.bf16.mxu0 %v932
  %1178 = vmatpush1.bf16.msra.mxu0 %v931
  %1179 = vmatprep.subr.bf16.mxu0 %v934
  %1180 = vmatpush1.bf16.msra.mxu0 %v933
  %1181 = vmatprep.subr.bf16.mxu0 %v936
  %1182 = vmatpush1.bf16.msra.mxu0 %v935
  %1183 = vmatprep.subr.bf16.mxu0 %v938
  %1184 = vmatpush1.bf16.msra.mxu0 %v937
  %1185 = vmatprep.subr.bf16.mxu0 %v940
  %1186 = vmatpush1.bf16.msra.mxu0 %v939
  %1187 = vmatprep.subr.bf16.mxu0 %v942
  %1188 = vmatpush1.bf16.msra.mxu0 %v941
  %1189 = vmatprep.subr.bf16.mxu0 %v944
  %1190 = vmatpush1.bf16.msra.mxu0 %v943
  %1191 = vmatprep.subr.bf16.mxu0 %v946
  %1192 = vmatpush1.bf16.msra.mxu0 %v945
  %1193 = vmatprep.subr.bf16.mxu0 %v948
  %1194 = vmatpush1.bf16.msra.mxu0 %v947
  %1195 = vmatprep.subr.bf16.mxu0 %v950
  %1196 = vmatpush1.bf16.msra.mxu0 %v949
  %1197 = vmatprep.subr.bf16.mxu0 %v952
  %1198 = vmatpush1.bf16.msra.mxu0 %v951
  %1199 = vmatprep.subr.bf16.mxu0 %v954
  %1200 = vmatpush1.bf16.msra.mxu0 %v953
  %1201 = vmatprep.mubr.bf16.mxu0 %v1152
  %1202 = vmatmul.mubr.bf16.gmra.mrb[0].mxu0 %v1133
  %v1203 = vpop.f32.mrb[0].mxu0
  %v1204 = vadd.f32 0.0, %v1203
  %v1205 = vpop.f32.mrb[0].mxu0
  %v1206 = vadd.f32 0.0, %v1205
  %v1207 = vpop.f32.mrb[0].mxu0
  %v1208 = vpop.f32.mrb[0].mxu0
  %1209 = vdwg.mxu0
  %1210 = vmatprep.subr.bf16.mxu0 %v956
  %1211 = vmatpush1.bf16.msra.mxu0 %v955
  %1212 = vmatprep.subr.bf16.mxu0 %v958
  %1213 = vmatpush1.bf16.msra.mxu0 %v957
  %1214 = vmatprep.subr.bf16.mxu0 %v960
  %1215 = vmatpush1.bf16.msra.mxu0 %v959
  %1216 = vmatprep.subr.bf16.mxu0 %v962
  %1217 = vmatpush1.bf16.msra.mxu0 %v961
  %1218 = vmatprep.subr.bf16.mxu0 %v964
  %1219 = vmatpush1.bf16.msra.mxu0 %v963
  %1220 = vmatprep.subr.bf16.mxu0 %v966
  %1221 = vmatpush1.bf16.msra.mxu0 %v965
  %1222 = vmatprep.subr.bf16.mxu0 %v968
  %1223 = vmatpush1.bf16.msra.mxu0 %v967
  %1224 = vmatprep.subr.bf16.mxu0 %v970
  %1225 = vmatpush1.bf16.msra.mxu0 %v969
  %1226 = vmatprep.subr.bf16.mxu0 %v972
  %1227 = vmatpush1.bf16.msra.mxu0 %v971
  %1228 = vmatprep.subr.bf16.mxu0 %v974
  %1229 = vmatpush1.bf16.msra.mxu0 %v973
  %1230 = vmatprep.subr.bf16.mxu0 %v976
  %1231 = vmatpush1.bf16.msra.mxu0 %v975
  %1232 = vmatprep.subr.bf16.mxu0 %v978
  %1233 = vmatpush1.bf16.msra.mxu0 %v977
  %1234 = vmatprep.subr.bf16.mxu0 %v980
  %1235 = vmatpush1.bf16.msra.mxu0 %v979
  %1236 = vmatprep.subr.bf16.mxu0 %v982
  %1237 = vmatpush1.bf16.msra.mxu0 %v981
  %1238 = vmatprep.subr.bf16.mxu0 %v984
  %1239 = vmatpush1.bf16.msra.mxu0 %v983
  %1240 = vmatprep.subr.bf16.mxu0 %v986
  %1241 = vmatpush1.bf16.msra.mxu0 %v985
  %1242 = vmatprep.mubr.bf16.mxu0 %v1167
  %1243 = vmatmul.mubr.bf16.gmra.mrb[0].mxu0 %v1159
  %v1244 = vpop.f32.mrb[0].mxu0
  %v1245 = vadd.f32 %v1204, %v1244
  %v1246 = vpop.f32.mrb[0].mxu0
  %v1247 = vadd.f32 %v1206, %v1246
  %v1248 = vpop.f32.mrb[0].mxu0
  %v1249 = vpop.f32.mrb[0].mxu0
  %1250 = vdwg.mxu0
  %v1251 = vrot.slane %v1127, 4
  %v1252 = vadd.f32 %v1127, %v1251
  %v1253 = vrot.slane %v1252, 2
  %v1254 = vadd.f32 %v1252, %v1253
  %v1255 = vrot.slane %v1254, 1
  %v1256 = vadd.f32 %v1254, %v1255
  %v1257 = vrot.slane %v1129, 4
  %v1258 = vadd.f32 %v1129, %v1257
  %v1259 = vrot.slane %v1258, 2
  %v1260 = vadd.f32 %v1258, %v1259
  %v1261 = vrot.slane %v1260, 1
  %v1262 = vadd.f32 %v1260, %v1261
  %v1263 = vadd.f32 %v1256, 0.0
  %v1264 = vadd.f32 %v1262, 0.0
  %v1265 = vrot.slane %v1245, 4
  %v1266 = vadd.f32 %v1245, %v1265
  %v1267 = vrot.slane %v1266, 2
  %v1268 = vadd.f32 %v1266, %v1267
  %v1269 = vrot.slane %v1268, 1
  %v1270 = vadd.f32 %v1268, %v1269
  %v1271 = vrot.slane %v1247, 4
  %v1272 = vadd.f32 %v1247, %v1271
  %v1273 = vrot.slane %v1272, 2
  %v1274 = vadd.f32 %v1272, %v1273
  %v1275 = vrot.slane %v1274, 1
  %v1276 = vadd.f32 %v1274, %v1275
  %v1277 = vadd.f32 %v1263, %v1270
  %v1278 = vadd.f32 %v1264, %v1276
  %v1279 = vld [vmem:[%s3] sm:$0xff]
  %v1280 = vld [vmem:[%s3 + $0x8] sm:$0xff]
  %v1281 = vld [vmem:[%s3 + $0x10] sm:$0xff]
  %v1282 = vld [vmem:[%s3 + $0x18] sm:$0xff]
  %v1283 = vld [vmem:[%s3 + $0x20] sm:$0xff]
  %v1284 = vld [vmem:[%s3 + $0x28] sm:$0xff]
  %v1285 = vld [vmem:[%s3 + $0x30] sm:$0xff]
  %v1286 = vld [vmem:[%s3 + $0x38] sm:$0xff]
  %v1287 = vld [vmem:[%s3 + $0x40] sm:$0xff]
  %v1288 = vld [vmem:[%s3 + $0x48] sm:$0xff]
  %v1289 = vld [vmem:[%s3 + $0x50] sm:$0xff]
  %v1290 = vld [vmem:[%s3 + $0x58] sm:$0xff]
  %v1291 = vld [vmem:[%s3 + $0x60] sm:$0xff]
  %v1292 = vld [vmem:[%s3 + $0x68] sm:$0xff]
  %v1293 = vld [vmem:[%s3 + $0x70] sm:$0xff]
  %v1294 = vld [vmem:[%s3 + $0x78] sm:$0xff]
  %v1295 = vld [vmem:[%s3 + $0x80] sm:$0xff]
  %v1296 = vld [vmem:[%s3 + $0x88] sm:$0xff]
  %v1297 = vld [vmem:[%s3 + $0x90] sm:$0xff]
  %v1298 = vld [vmem:[%s3 + $0x98] sm:$0xff]
  %v1299 = vld [vmem:[%s3 + $0xa0] sm:$0xff]
  %v1300 = vld [vmem:[%s3 + $0xa8] sm:$0xff]
  %v1301 = vld [vmem:[%s3 + $0xb0] sm:$0xff]
  %v1302 = vld [vmem:[%s3 + $0xb8] sm:$0xff]
  %v1303 = vld [vmem:[%s3 + $0xc0] sm:$0xff]
  %v1304 = vld [vmem:[%s3 + $0xc8] sm:$0xff]
  %v1305 = vld [vmem:[%s3 + $0xd0] sm:$0xff]
  %v1306 = vld [vmem:[%s3 + $0xd8] sm:$0xff]
  %v1307 = vld [vmem:[%s3 + $0xe0] sm:$0xff]
  %v1308 = vld [vmem:[%s3 + $0xe8] sm:$0xff]
  %v1309 = vld [vmem:[%s3 + $0xf0] sm:$0xff]
  %v1310 = vld [vmem:[%s3 + $0xf8] sm:$0xff]
  %1311 = vmatprep.subr.mxu0 0.0
  %1312 = vmatpush1.msra.mxu0 %v1279
  %1313 = vmatprep.subr.mxu0 0.0
  %1314 = vmatpush1.msra.mxu0 %v1280
  %1315 = vmatprep.subr.mxu0 0.0
  %1316 = vmatpush1.msra.mxu0 %v1281
  %1317 = vmatprep.subr.mxu0 0.0
  %1318 = vmatpush1.msra.mxu0 %v1282
  %1319 = vmatprep.subr.mxu0 0.0
  %1320 = vmatpush1.msra.mxu0 %v1283
  %1321 = vmatprep.subr.mxu0 0.0
  %1322 = vmatpush1.msra.mxu0 %v1284
  %1323 = vmatprep.subr.mxu0 0.0
  %1324 = vmatpush1.msra.mxu0 %v1285
  %1325 = vmatprep.subr.mxu0 0.0
  %1326 = vmatpush1.msra.mxu0 %v1286
  %1327 = vmatprep.subr.mxu0 0.0
  %1328 = vmatpush1.msra.mxu0 %v1287
  %1329 = vmatprep.subr.mxu0 0.0
  %1330 = vmatpush1.msra.mxu0 %v1288
  %1331 = vmatprep.subr.mxu0 0.0
  %1332 = vmatpush1.msra.mxu0 %v1289
  %1333 = vmatprep.subr.mxu0 0.0
  %1334 = vmatpush1.msra.mxu0 %v1290
  %1335 = vmatprep.subr.mxu0 0.0
  %1336 = vmatpush1.msra.mxu0 %v1291
  %1337 = vmatprep.subr.mxu0 0.0
  %1338 = vmatpush1.msra.mxu0 %v1292
  %1339 = vmatprep.subr.mxu0 0.0
  %1340 = vmatpush1.msra.mxu0 %v1293
  %1341 = vmatprep.subr.mxu0 0.0
  %1342 = vmatpush1.msra.mxu0 %v1294
  %1343 = vmatprep.subr.mxu0 0.0
  %1344 = vmatpush1.msra.mxu0 %v1295
  %1345 = vmatprep.subr.mxu0 0.0
  %1346 = vmatpush1.msra.mxu0 %v1296
  %1347 = vmatprep.subr.mxu0 0.0
  %1348 = vmatpush1.msra.mxu0 %v1297
  %1349 = vmatprep.subr.mxu0 0.0
  %1350 = vmatpush1.msra.mxu0 %v1298
  %1351 = vmatprep.subr.mxu0 0.0
  %1352 = vmatpush1.msra.mxu0 %v1299
  %1353 = vmatprep.subr.mxu0 0.0
  %1354 = vmatpush1.msra.mxu0 %v1300
  %1355 = vmatprep.subr.mxu0 0.0
  %1356 = vmatpush1.msra.mxu0 %v1301
  %1357 = vmatprep.subr.mxu0 0.0
  %1358 = vmatpush1.msra.mxu0 %v1302
  %1359 = vmatprep.subr.mxu0 0.0
  %1360 = vmatpush1.msra.mxu0 %v1303
  %1361 = vmatprep.subr.mxu0 0.0
  %1362 = vmatpush1.msra.mxu0 %v1304
  %1363 = vmatprep.subr.mxu0 0.0
  %1364 = vmatpush1.msra.mxu0 %v1305
  %1365 = vmatprep.subr.mxu0 0.0
  %1366 = vmatpush1.msra.mxu0 %v1306
  %1367 = vmatprep.subr.mxu0 0.0
  %1368 = vmatpush1.msra.mxu0 %v1307
  %1369 = vmatprep.subr.mxu0 0.0
  %1370 = vmatpush1.msra.mxu0 %v1308
  %1371 = vmatprep.subr.mxu0 0.0
  %1372 = vmatpush1.msra.mxu0 %v1309
  %1373 = vmatprep.subr.mxu0 0.0
  %1374 = vmatpush1.msra.mxu0 %v1310
  %1375 = vmatprep.mubr.f32.mxu0 %v1278
  %1376 = vmatmul.mubr.f32.gmra.mrb[0].mxu0 %v1277
  %v1377 = vpop.f32.mrb[0].mxu0
  %v1378 = vadd.f32 0.0, %v1377
  %v1379 = vpop.f32.mrb[0].mxu0
  %1380 = vdwg.mxu0
  %v1381 = vmul.f32 %v1378, 0.001953125
  %v1382 = vld [vmem:[%s4] sm:$0xff]
  %v1383 = vld [vmem:[%s4 + $0x8] sm:$0xff]
  %v1385 = vsel %vm269, %v1381, 0
  %1387 = vmatprep.subr.mxu0 %v1383
  %1388 = vmatpush1.msra.mxu0 %v1382
  %1389 = vmatprep.subr.mxu0 0.0
  %1390 = vmatpush1.msra.mxu0 0.0
  %1391 = vmatprep.subr.mxu0 0.0
  %1392 = vmatpush1.msra.mxu0 0.0
  %1393 = vmatprep.subr.mxu0 0.0
  %1394 = vmatpush1.msra.mxu0 0.0
  %1395 = vmatprep.subr.mxu0 0.0
  %1396 = vmatpush1.msra.mxu0 0.0
  %1397 = vmatprep.subr.mxu0 0.0
  %1398 = vmatpush1.msra.mxu0 0.0
  %1399 = vmatprep.subr.mxu0 0.0
  %1400 = vmatpush1.msra.mxu0 0.0
  %1401 = vmatprep.subr.mxu0 0.0
  %1402 = vmatpush1.msra.mxu0 0.0
  %1403 = vmatprep.subr.mxu0 0.0
  %1404 = vmatpush1.msra.mxu0 0.0
  %1405 = vmatprep.subr.mxu0 0.0
  %1406 = vmatpush1.msra.mxu0 0.0
  %1407 = vmatprep.subr.mxu0 0.0
  %1408 = vmatpush1.msra.mxu0 0.0
  %1409 = vmatprep.subr.mxu0 0.0
  %1410 = vmatpush1.msra.mxu0 0.0
  %1411 = vmatprep.subr.mxu0 0.0
  %1412 = vmatpush1.msra.mxu0 0.0
  %1413 = vmatprep.subr.mxu0 0.0
  %1414 = vmatpush1.msra.mxu0 0.0
  %1415 = vmatprep.subr.mxu0 0.0
  %1416 = vmatpush1.msra.mxu0 0.0
  %1417 = vmatprep.subr.mxu0 0.0
  %1418 = vmatpush1.msra.mxu0 0.0
  %1419 = vmatprep.subr.mxu0 0.0
  %1420 = vmatpush1.msra.mxu0 0.0
  %1421 = vmatprep.subr.mxu0 0.0
  %1422 = vmatpush1.msra.mxu0 0.0
  %1423 = vmatprep.subr.mxu0 0.0
  %1424 = vmatpush1.msra.mxu0 0.0
  %1425 = vmatprep.subr.mxu0 0.0
  %1426 = vmatpush1.msra.mxu0 0.0
  %1427 = vmatprep.subr.mxu0 0.0
  %1428 = vmatpush1.msra.mxu0 0.0
  %1429 = vmatprep.subr.mxu0 0.0
  %1430 = vmatpush1.msra.mxu0 0.0
  %1431 = vmatprep.subr.mxu0 0.0
  %1432 = vmatpush1.msra.mxu0 0.0
  %1433 = vmatprep.subr.mxu0 0.0
  %1434 = vmatpush1.msra.mxu0 0.0
  %1435 = vmatprep.subr.mxu0 0.0
  %1436 = vmatpush1.msra.mxu0 0.0
  %1437 = vmatprep.subr.mxu0 0.0
  %1438 = vmatpush1.msra.mxu0 0.0
  %1439 = vmatprep.subr.mxu0 0.0
  %1440 = vmatpush1.msra.mxu0 0.0
  %1441 = vmatprep.subr.mxu0 0.0
  %1442 = vmatpush1.msra.mxu0 0.0
  %1443 = vmatprep.subr.mxu0 0.0
  %1444 = vmatpush1.msra.mxu0 0.0
  %1445 = vmatprep.subr.mxu0 0.0
  %1446 = vmatpush1.msra.mxu0 0.0
  %1447 = vmatprep.subr.mxu0 0.0
  %1448 = vmatpush1.msra.mxu0 0.0
  %1449 = vmatprep.subr.mxu0 0.0
  %1450 = vmatpush1.msra.mxu0 0.0
  %1451 = vmatprep.mubr.f32.mxu0 0.0
  %1452 = vmatmul.mubr.f32.gmra.mrb[0].mxu0 %v1385
  %v1453 = vpop.f32.mrb[0].mxu0
  %v1454 = vadd.f32 0.0, %v1453
  %v1455 = vpop.f32.mrb[0].mxu0
  %v1456 = vadd.f32 0.0, %v1455
  %1457 = vdwg.mxu0
  %v1458 = vlaneseq
  %v1459 = vshrl.u32 %v1458, 7
  %v1460 = vsub.s32 0, %v1459
  %v1461 = vrot.slane %v1454, %v1460
  %v1462 = vlaneseq
  %v1463 = vshrl.u32 %v1462, 7
  %v1464 = vsub.s32 0, %v1463
  %v1465 = vrot.slane %v1456, %v1464
  %v1466 = vsub.f32 %v1127, %v1461
  %v1467 = vsub.f32 %v1129, %v1465
  %v1468 = vmul.f32 %v1466, %v1466
  %v1469 = vmul.f32 %v1467, %v1467
  %v1470 = vrot.slane %v1468, 4
  %v1471 = vadd.f32 %v1468, %v1470
  %v1472 = vrot.slane %v1471, 2
  %v1473 = vadd.f32 %v1471, %v1472
  %v1474 = vrot.slane %v1473, 1
  %v1475 = vadd.f32 %v1473, %v1474
  %v1476 = vrot.slane %v1469, 4
  %v1477 = vadd.f32 %v1469, %v1476
  %v1478 = vrot.slane %v1477, 2
  %v1479 = vadd.f32 %v1477, %v1478
  %v1480 = vrot.slane %v1479, 1
  %v1481 = vadd.f32 %v1479, %v1480
  %v1482 = vadd.f32 %v1475, 0.0
  %v1483 = vadd.f32 %v1481, 0.0
  %v1484 = vsub.f32 %v1245, %v1461
  %v1485 = vsub.f32 %v1247, %v1465
  %v1486 = vmul.f32 %v1484, %v1484
  %v1487 = vmul.f32 %v1485, %v1485
  %v1488 = vrot.slane %v1486, 4
  %v1489 = vadd.f32 %v1486, %v1488
  %v1490 = vrot.slane %v1489, 2
  %v1491 = vadd.f32 %v1489, %v1490
  %v1492 = vrot.slane %v1491, 1
  %v1493 = vadd.f32 %v1491, %v1492
  %v1494 = vrot.slane %v1487, 4
  %v1495 = vadd.f32 %v1487, %v1494
  %v1496 = vrot.slane %v1495, 2
  %v1497 = vadd.f32 %v1495, %v1496
  %v1498 = vrot.slane %v1497, 1
  %v1499 = vadd.f32 %v1497, %v1498
  %v1500 = vadd.f32 %v1482, %v1493
  %v1501 = vadd.f32 %v1483, %v1499
  %1502 = vmatprep.subr.mxu0 0.0
  %1503 = vmatpush1.msra.mxu0 %v1279
  %1504 = vmatprep.subr.mxu0 0.0
  %1505 = vmatpush1.msra.mxu0 %v1280
  %1506 = vmatprep.subr.mxu0 0.0
  %1507 = vmatpush1.msra.mxu0 %v1281
  %1508 = vmatprep.subr.mxu0 0.0
  %1509 = vmatpush1.msra.mxu0 %v1282
  %1510 = vmatprep.subr.mxu0 0.0
  %1511 = vmatpush1.msra.mxu0 %v1283
  %1512 = vmatprep.subr.mxu0 0.0
  %1513 = vmatpush1.msra.mxu0 %v1284
  %1514 = vmatprep.subr.mxu0 0.0
  %1515 = vmatpush1.msra.mxu0 %v1285
  %1516 = vmatprep.subr.mxu0 0.0
  %1517 = vmatpush1.msra.mxu0 %v1286
  %1518 = vmatprep.subr.mxu0 0.0
  %1519 = vmatpush1.msra.mxu0 %v1287
  %1520 = vmatprep.subr.mxu0 0.0
  %1521 = vmatpush1.msra.mxu0 %v1288
  %1522 = vmatprep.subr.mxu0 0.0
  %1523 = vmatpush1.msra.mxu0 %v1289
  %1524 = vmatprep.subr.mxu0 0.0
  %1525 = vmatpush1.msra.mxu0 %v1290
  %1526 = vmatprep.subr.mxu0 0.0
  %1527 = vmatpush1.msra.mxu0 %v1291
  %1528 = vmatprep.subr.mxu0 0.0
  %1529 = vmatpush1.msra.mxu0 %v1292
  %1530 = vmatprep.subr.mxu0 0.0
  %1531 = vmatpush1.msra.mxu0 %v1293
  %1532 = vmatprep.subr.mxu0 0.0
  %1533 = vmatpush1.msra.mxu0 %v1294
  %1534 = vmatprep.subr.mxu0 0.0
  %1535 = vmatpush1.msra.mxu0 %v1295
  %1536 = vmatprep.subr.mxu0 0.0
  %1537 = vmatpush1.msra.mxu0 %v1296
  %1538 = vmatprep.subr.mxu0 0.0
  %1539 = vmatpush1.msra.mxu0 %v1297
  %1540 = vmatprep.subr.mxu0 0.0
  %1541 = vmatpush1.msra.mxu0 %v1298
  %1542 = vmatprep.subr.mxu0 0.0
  %1543 = vmatpush1.msra.mxu0 %v1299
  %1544 = vmatprep.subr.mxu0 0.0
  %1545 = vmatpush1.msra.mxu0 %v1300
  %1546 = vmatprep.subr.mxu0 0.0
  %1547 = vmatpush1.msra.mxu0 %v1301
  %1548 = vmatprep.subr.mxu0 0.0
  %1549 = vmatpush1.msra.mxu0 %v1302
  %1550 = vmatprep.subr.mxu0 0.0
  %1551 = vmatpush1.msra.mxu0 %v1303
  %1552 = vmatprep.subr.mxu0 0.0
  %1553 = vmatpush1.msra.mxu0 %v1304
  %1554 = vmatprep.subr.mxu0 0.0
  %1555 = vmatpush1.msra.mxu0 %v1305
  %1556 = vmatprep.subr.mxu0 0.0
  %1557 = vmatpush1.msra.mxu0 %v1306
  %1558 = vmatprep.subr.mxu0 0.0
  %1559 = vmatpush1.msra.mxu0 %v1307
  %1560 = vmatprep.subr.mxu0 0.0
  %1561 = vmatpush1.msra.mxu0 %v1308
  %1562 = vmatprep.subr.mxu0 0.0
  %1563 = vmatpush1.msra.mxu0 %v1309
  %1564 = vmatprep.subr.mxu0 0.0
  %1565 = vmatpush1.msra.mxu0 %v1310
  %1566 = vmatprep.mubr.f32.mxu0 %v1501
  %1567 = vmatmul.mubr.f32.gmra.mrb[0].mxu0 %v1500
  %v1568 = vpop.f32.mrb[0].mxu0
  %v1569 = vadd.f32 0.0, %v1568
  %v1570 = vpop.f32.mrb[0].mxu0
  %1571 = vdwg.mxu0
  %v1572 = vmul.f32 %v1569, 0.001953125
  %v1573 = vld [vmem:[%s5 + $0x2] sm:$0x1]
  %v1574 = vadd.f32 %v1572, 1e-05
  %v1575 = vrsqrt.pop %v1574
  %v1576 = vmul.f32 %v1573, %v1575
  %v1577 = vld [vmem:[%s5 + $0x3] sm:$0x1]
  %v1578 = vmul.f32 %v1381, %v1576
  %v1579 = vsub.f32 %v1577, %v1578
  %v1581 = vrot.slane %v1579, 7
  %v1583 = vsel %vm455, %v1576, %v1581
  %v1585 = vsel %vm269, %v1583, 0
  %1587 = vmatprep.subr.mxu0 %v1383
  %1588 = vmatpush1.msra.mxu0 %v1382
  %1589 = vmatprep.subr.mxu0 0.0
  %1590 = vmatpush1.msra.mxu0 0.0
  %1591 = vmatprep.subr.mxu0 0.0
  %1592 = vmatpush1.msra.mxu0 0.0
  %1593 = vmatprep.subr.mxu0 0.0
  %1594 = vmatpush1.msra.mxu0 0.0
  %1595 = vmatprep.subr.mxu0 0.0
  %1596 = vmatpush1.msra.mxu0 0.0
  %1597 = vmatprep.subr.mxu0 0.0
  %1598 = vmatpush1.msra.mxu0 0.0
  %1599 = vmatprep.subr.mxu0 0.0
  %1600 = vmatpush1.msra.mxu0 0.0
  %1601 = vmatprep.subr.mxu0 0.0
  %1602 = vmatpush1.msra.mxu0 0.0
  %1603 = vmatprep.subr.mxu0 0.0
  %1604 = vmatpush1.msra.mxu0 0.0
  %1605 = vmatprep.subr.mxu0 0.0
  %1606 = vmatpush1.msra.mxu0 0.0
  %1607 = vmatprep.subr.mxu0 0.0
  %1608 = vmatpush1.msra.mxu0 0.0
  %1609 = vmatprep.subr.mxu0 0.0
  %1610 = vmatpush1.msra.mxu0 0.0
  %1611 = vmatprep.subr.mxu0 0.0
  %1612 = vmatpush1.msra.mxu0 0.0
  %1613 = vmatprep.subr.mxu0 0.0
  %1614 = vmatpush1.msra.mxu0 0.0
  %1615 = vmatprep.subr.mxu0 0.0
  %1616 = vmatpush1.msra.mxu0 0.0
  %1617 = vmatprep.subr.mxu0 0.0
  %1618 = vmatpush1.msra.mxu0 0.0
  %1619 = vmatprep.subr.mxu0 0.0
  %1620 = vmatpush1.msra.mxu0 0.0
  %1621 = vmatprep.subr.mxu0 0.0
  %1622 = vmatpush1.msra.mxu0 0.0
  %1623 = vmatprep.subr.mxu0 0.0
  %1624 = vmatpush1.msra.mxu0 0.0
  %1625 = vmatprep.subr.mxu0 0.0
  %1626 = vmatpush1.msra.mxu0 0.0
  %1627 = vmatprep.subr.mxu0 0.0
  %1628 = vmatpush1.msra.mxu0 0.0
  %1629 = vmatprep.subr.mxu0 0.0
  %1630 = vmatpush1.msra.mxu0 0.0
  %1631 = vmatprep.subr.mxu0 0.0
  %1632 = vmatpush1.msra.mxu0 0.0
  %1633 = vmatprep.subr.mxu0 0.0
  %1634 = vmatpush1.msra.mxu0 0.0
  %1635 = vmatprep.subr.mxu0 0.0
  %1636 = vmatpush1.msra.mxu0 0.0
  %1637 = vmatprep.subr.mxu0 0.0
  %1638 = vmatpush1.msra.mxu0 0.0
  %1639 = vmatprep.subr.mxu0 0.0
  %1640 = vmatpush1.msra.mxu0 0.0
  %1641 = vmatprep.subr.mxu0 0.0
  %1642 = vmatpush1.msra.mxu0 0.0
  %1643 = vmatprep.subr.mxu0 0.0
  %1644 = vmatpush1.msra.mxu0 0.0
  %1645 = vmatprep.subr.mxu0 0.0
  %1646 = vmatpush1.msra.mxu0 0.0
  %1647 = vmatprep.subr.mxu0 0.0
  %1648 = vmatpush1.msra.mxu0 0.0
  %1649 = vmatprep.subr.mxu0 0.0
  %1650 = vmatpush1.msra.mxu0 0.0
  %1651 = vmatprep.mubr.f32.mxu0 0.0
  %1652 = vmatmul.mubr.f32.gmra.mrb[0].mxu0 %v1585
  %v1653 = vpop.f32.mrb[0].mxu0
  %v1654 = vadd.f32 0.0, %v1653
  %v1655 = vpop.f32.mrb[0].mxu0
  %v1656 = vadd.f32 0.0, %v1655
  %1657 = vdwg.mxu0
  %v1658 = vlaneseq
  %v1659 = vshrl.u32 %v1658, 7
  %v1660 = vsub.s32 0, %v1659
  %v1661 = vrot.slane %v1654, %v1660
  %v1662 = vlaneseq
  %v1663 = vshrl.u32 %v1662, 7
  %v1664 = vsub.s32 0, %v1663
  %v1665 = vrot.slane %v1656, %v1664
  %v1666 = vmul.f32 %v1127, %v1661
  %v1667 = vmul.f32 %v1129, %v1665
  %v1668 = vlaneseq
  %v1669 = vshrl.u32 %v1668, 7
  %v1670 = vsub.s32 1, %v1669
  %v1671 = vrot.slane %v1654, %v1670
  %v1672 = vlaneseq
  %v1673 = vshrl.u32 %v1672, 7
  %v1674 = vsub.s32 1, %v1673
  %v1675 = vrot.slane %v1656, %v1674
  %v1676 = vadd.f32 %v1666, %v1671
  %v1677 = vadd.f32 %v1667, %v1675
  %v1678 = vmax.f32 %v1676, 0.0
  %v1679 = vmax.f32 %v1677, 0.0
  %1680 = vst [vmem:[%s6] sm:$0xff] %v1678
  %1681 = vst [vmem:[%s6 + $0x8] sm:$0xff] %v1679
  %v1682 = vmul.f32 %v1245, %v1661
  %v1683 = vmul.f32 %v1247, %v1665
  %v1684 = vadd.f32 %v1682, %v1671
  %v1685 = vadd.f32 %v1683, %v1675
  %v1686 = vmax.f32 %v1684, 0.0
  %v1687 = vmax.f32 %v1685, 0.0
  %s1688 = scalar_lea.vmem %s6, 16
  %1689 = vst [vmem:[%s1688] sm:$0xff] %v1686
  %1690 = vst [vmem:[%s1688 + $0x8] sm:$0xff] %v1687
  // Predicated region
  $region26: #{upblock_forward.1} parent=0 // pred_check
    _
  $region27: #{upblock_forward.1} parent=0 // pred_check_branch
    %1692 = sbr.rel (0) target = $region29
  $region28: #{upblock_forward.1} parent=0 // pred_region
    _
  $region29: #{upblock_forward.1} parent=0 // pred_fallthru
    _
  // Predicated region
  $region30: #{upblock_forward.1} parent=0 // pred_check
    _
  $region31: #{upblock_forward.1} parent=0 // pred_check_branch
    %1694 = sbr.rel (0) target = $region33
  $region32: #{upblock_forward.1} parent=0 // pred_region
    _
  $region33: #{upblock_forward.1} parent=0 // pred_fallthru
    _

</llo_original>
